<compile_context>
chip_gen: v5e
topology: v5e:2x2
jax: 0.10.0
libtpu: 0.0.40
codegen_flags: <defaults>
</compile_context>

<pallas_src>
import functools
import numpy as np
import jax
import jax.numpy as jnp
from jax.experimental import pallas as pl
from jax.experimental.pallas import tpu as pltpu

EMBED_DIM = 32        # small stand-in for 256
NUM_HEADS = 4
NUM_LAYERS = 2
FFN_DIM = 64          # small stand-in for PyTorch default dim_feedforward=2048
NUM_MODALITIES = 3
LN_EPS = 1e-5
HEAD_DIM = EMBED_DIM // NUM_HEADS


# ----------------------------- kernel helpers --------------------------------
def _linear(x, w, b):
    # x: (M, in) already in w.dtype, w: (out, in) [PyTorch nn.Linear layout],
    # b: (1, out) f32.  Accumulation stays f32.
    y = jax.lax.dot_general(x, w, (((1,), (1,)), ((), ())),
                            preferred_element_type=jnp.float32)
    return y + b


def _head_sum(prod, hsum):
    # (M, E) x (E, H) -> (M, H): per-head lane-group reduction via a tiny matmul
    # (avoids lane-axis slicing / reshapes).
    return jax.lax.dot_general(prod, hsum, (((1,), (0,)), ((), ())),
                               preferred_element_type=jnp.float32)


def _head_bcast(p, hbc):
    # (M, H) x (H, E) -> (M, E): repeat each head's prob across its Dh lanes.
    return jax.lax.dot_general(p, hbc, (((1,), (0,)), ((), ())),
                               preferred_element_type=jnp.float32)


def _layer_norm(x, gamma, beta):
    mu = jnp.mean(x, axis=-1, keepdims=True)
    xc = x - mu
    var = jnp.mean(xc * xc, axis=-1, keepdims=True)
    return xc * jax.lax.rsqrt(var + LN_EPS) * gamma + beta


# --------------------------------- kernel ------------------------------------
def _fusion_kernel(x_ref, pos_ref, hsum_ref, hbc_ref,
                   in_w_ref, in_b_ref, out_w_ref, out_b_ref,
                   ln1_w_ref, ln1_b_ref, ln2_w_ref, ln2_b_ref,
                   ff1_w_ref, ff1_b_ref, ff2_w_ref, ff2_b_ref,
                   o_ref, *, fuse_qkv):
    S, TB, E = x_ref.shape                      # TB batch elements per grid step
    M = S * TB
    scale = 1.0 / float(np.sqrt(HEAD_DIM))
    mm = in_w_ref.dtype                         # MXU operand dtype (bf16 or f32)
    hsum = hsum_ref[...]                        # (E, H) block-diag head-reduce map
    hbc = hbc_ref[...]                          # (H, E) head-broadcast map

    # (S,TB,E) + (S,1,E) -> modality-major (S*TB, E); free row-major collapse
    # (last dim unchanged, TB % 8 == 0).
    x = (x_ref[...].astype(jnp.float32)
         + pos_ref[...].astype(jnp.float32)).reshape(M, E)

    for l in range(NUM_LAYERS):                 # static unroll (L = 2)
        xm = x.astype(mm)                       # single activation cast for QKV
        if fuse_qkv:
            # one fused (M,E)x(E,3E) matmul; lane slices at multiples of E
            # (lane-aligned when E % 128 == 0, i.e. real dims).
            qkv = _linear(xm, in_w_ref[l], in_b_ref[l])           # (M, 3E) f32
            q = qkv[:, 0:E] * scale                               # scale folded
            k = qkv[:, E:2 * E]
            v = qkv[:, 2 * E:3 * E]
        else:
            # demo path (E=32): q/k/v split lives on a leading param axis so the
            # kernel never lane-slices at offsets 32/64.
            q = _linear(xm, in_w_ref[l, 0], in_b_ref[l, 0]) * scale
            k = _linear(xm, in_w_ref[l, 1], in_b_ref[l, 1])
            v = _linear(xm, in_w_ref[l, 2], in_b_ref[l, 2])

        # all 9 q_i*k_j products stacked on the sublane axis -> ONE head-sum
        # matmul per layer (blocks ordered i-outer / j-inner, TB % 8 == 0 so all
        # slices are sublane-aligned).
        prod9 = jnp.concatenate(
            [q[i * TB:(i + 1) * TB] * k[j * TB:(j + 1) * TB]
             for i in range(S) for j in range(S)], axis=0)        # (S*S*TB, E)
        s9 = _head_sum(prod9.astype(mm), hsum)                    # (S*S*TB, H) f32

        # softmax over key modality j within each query modality i (f32 stats).
        p_blocks = []
        for i in range(S):
            blk = [s9[(i * S + j) * TB:(i * S + j + 1) * TB] for j in range(S)]
            m_i = functools.reduce(jnp.maximum, blk)
            e_ij = [jnp.exp(b - m_i) for b in blk]
            inv = pl.reciprocal(functools.reduce(jnp.add, e_ij), approx=True)
            p_blocks += [e * inv for e in e_ij]
        p9 = jnp.concatenate(p_blocks, axis=0)                    # (S*S*TB, H)

        # ONE head-broadcast matmul; block (i,j) is weighted by v_j, then summed
        # over j per query modality i.
        w9 = _head_bcast(p9.astype(mm), hbc)                      # (S*S*TB, E) f32
        weighted = w9 * jnp.concatenate([v] * S, axis=0)          # (S*S*TB, E)
        attn = jnp.concatenate(
            [functools.reduce(
                jnp.add,
                [weighted[(i * S + j) * TB:(i * S + j + 1) * TB]
                 for j in range(S)])
             for i in range(S)], axis=0)                          # (M, E)

        attn = _linear(attn.astype(mm), out_w_ref[l], out_b_ref[l])
        # post-norm residual blocks (norm_first=False)
        x = _layer_norm(x + attn, ln1_w_ref[l], ln1_b_ref[l])

        h = jnp.maximum(_linear(x.astype(mm), ff1_w_ref[l], ff1_b_ref[l]), 0.0)
        f = _linear(h.astype(mm), ff2_w_ref[l], ff2_b_ref[l])
        x = _layer_norm(x + f, ln2_w_ref[l], ln2_b_ref[l])

    # mean over the modality axis -> (TB, E) store.  Lane-dense at the real
    # E=256; at the demo E=32 the store is lane-masked (packing 4 batch rows per
    # output row would fix it but is irrelevant at production dims).
    acc = functools.reduce(jnp.add, [x[s * TB:(s + 1) * TB] for s in range(S)])
    o_ref[...] = (acc * (1.0 / S)).astype(o_ref.dtype)


# -------------------------------- wrapper -------------------------------------
def _round_up(n, m):
    return ((n + m - 1) // m) * m


def _pick_tb(b):
    # TB must be a multiple of 8 (sublane alignment).  Aim for >= 2 grid steps
    # so the 'parallel' grid axis can shard across v7x's 2 TensorCores, and cap
    # TB so the (3*TB, FFN) f32 intermediate stays in VMEM at real dims:
    #   v5e / v7x: cap 128 (3*TB = 384 rows = 3 full 128-row MXU passes);
    #   v6e: the cap can be raised to 256 (3*TB = 768) with a larger vmem limit.
    return min(128, _round_up(max((b + 1) // 2, 1), 8))


def transformer_fusion(modalities, params, *, tb=None, matmul_dtype=jnp.bfloat16):
    """modalities: list of (B, E) arrays [video, audio, text]. Returns (B, E).

    matmul_dtype=bf16 (default) feeds the bf16-native MXU on v5e/v6e/v7x with
    f32 accumulation and f32 LayerNorm/softmax statistics; matmul_dtype=f32 is
    a high-precision mode (multi-pass MXU emulation, slower).
    """
    x = jnp.stack(modalities, axis=0)                 # (S, B, E), modality-major
    S, B, E = x.shape
    tb = _pick_tb(B) if tb is None else _round_up(tb, 8)
    b_pad = _round_up(B, tb)
    if b_pad != B:
        x = jnp.pad(x, ((0, 0), (0, b_pad - B), (0, 0)))   # padded rows sliced off

    L = params['in_w'].shape[0]
    fuse_qkv = (E % 128 == 0)                         # lane-aligned q/k/v split
    if fuse_qkv:
        in_w = params['in_w'].reshape(L, 3 * E, E).astype(matmul_dtype)
        in_b = params['in_b'].reshape(L, 1, 3 * E)
    else:
        in_w = params['in_w'].astype(matmul_dtype)
        in_b = params['in_b']

    # block-diagonal head maps: hsum[e, h] = 1 iff lane e belongs to head h.
    hsum = (jnp.arange(E)[:, None] // HEAD_DIM
            == jnp.arange(NUM_HEADS)[None, :]).astype(matmul_dtype)   # (E, H)
    hbc = jnp.transpose(hsum)                                          # (H, E)

    p_args = (in_w, in_b,
              params['out_w'].astype(matmul_dtype), params['out_b'],
              params['ln1_w'], params['ln1_b'],
              params['ln2_w'], params['ln2_b'],
              params['ff1_w'].astype(matmul_dtype), params['ff1_b'],
              params['ff2_w'].astype(matmul_dtype), params['ff2_b'])

    def whole(a):  # full-array block, resident across all grid steps
        idx = (0,) * a.ndim
        return pl.BlockSpec(a.shape, lambda g, idx=idx: idx)

    in_specs = ([pl.BlockSpec((S, tb, E), lambda g: (0, g, 0)),   # one batch block
                 whole(params['pos']), whole(hsum), whole(hbc)]
                + [whole(a) for a in p_args])

    out = pl.pallas_call(
        functools.partial(_fusion_kernel, fuse_qkv=fuse_qkv),
        out_shape=jax.ShapeDtypeStruct((b_pad, E), x.dtype),
        grid=(b_pad // tb,),
        in_specs=in_specs,
        out_specs=pl.BlockSpec((tb, E), lambda g: (g, 0)),
        compiler_params=pltpu.CompilerParams(
            dimension_semantics=("parallel",),
            # demo sizes are tiny; at real dims (E=256, FFN=2048) re-derive per
            # generation: ~64-96 MiB on v5e/v6e (128 MiB VMEM), ~48-56 MiB on
            # v7x (64 MiB VMEM, keep weights bf16 and TB around 128).
            vmem_limit_bytes=32 * 1024 * 1024),
    )(x, params['pos'], hsum, hbc, *p_args)
    return out[:B]                                     # (B, E)


# ------------------------- deterministic parameters ---------------------------
def init_params(key):
    L, E, F, S = NUM_LAYERS, EMBED_DIM, FFN_DIM, NUM_MODALITIES
    ks = jax.random.split(key, 8)

    def nrm(k, shape, scale=0.05):
        return scale * jax.random.normal(k, shape, jnp.float32)

    return dict(
        pos=nrm(ks[0], (S, 1, E), 1.0),
        in_w=nrm(ks[1], (L, 3, E, E)),        # [q,k,v] on axis 1, (out,in) layout
        in_b=nrm(ks[2], (L, 3, 1, E)),
        out_w=nrm(ks[3], (L, E, E)),
        out_b=jnp.zeros((L, 1, E), jnp.float32),
        ln1_w=jnp.ones((L, 1, E), jnp.float32),
        ln1_b=jnp.zeros((L, 1, E), jnp.float32),
        ln2_w=jnp.ones((L, 1, E), jnp.float32),
        ln2_b=jnp.zeros((L, 1, E), jnp.float32),
        ff1_w=nrm(ks[4], (L, F, E)),
        ff1_b=nrm(ks[5], (L, 1, F)),
        ff2_w=nrm(ks[6], (L, E, F)),
        ff2_b=nrm(ks[7], (L, 1, E)),
    )


# -------------------------- pure-JAX reference --------------------------------
def _ln_ref(x, g, b):
    mu = x.mean(-1, keepdims=True)
    var = ((x - mu) ** 2).mean(-1, keepdims=True)
    return (x - mu) * jax.lax.rsqrt(var + LN_EPS) * g + b


def ref_forward(modalities, params):
    x = jnp.stack(modalities, axis=1) + jnp.transpose(params['pos'], (1, 0, 2))
    B, S, E = x.shape
    H, Dh = NUM_HEADS, HEAD_DIM
    hp = jax.lax.Precision.HIGHEST
    for l in range(NUM_LAYERS):
        q = jnp.einsum('bse,fe->bsf', x, params['in_w'][l, 0], precision=hp) + params['in_b'][l, 0]
        k = jnp.einsum('bse,fe->bsf', x, params['in_w'][l, 1], precision=hp) + params['in_b'][l, 1]
        v = jnp.einsum('bse,fe->bsf', x, params['in_w'][l, 2], precision=hp) + params['in_b'][l, 2]

        def sh(t):
            return t.reshape(B, S, H, Dh).transpose(0, 2, 1, 3)

        qh, kh, vh = sh(q), sh(k), sh(v)
        s = jnp.einsum('bhqd,bhkd->bhqk', qh, kh, precision=hp) / np.sqrt(Dh)
        p = jax.nn.softmax(s, axis=-1)
        o = jnp.einsum('bhqk,bhkd->bhqd', p, vh, precision=hp)
        o = o.transpose(0, 2, 1, 3).reshape(B, S, E)
        o = jnp.einsum('bse,fe->bsf', o, params['out_w'][l], precision=hp) + params['out_b'][l]
        x = _ln_ref(x + o, params['ln1_w'][l], params['ln1_b'][l])

        h = jax.nn.relu(jnp.einsum('bse,fe->bsf', x, params['ff1_w'][l], precision=hp)
                        + params['ff1_b'][l])
        f = jnp.einsum('bsf,ef->bse', h, params['ff2_w'][l], precision=hp) + params['ff2_b'][l]
        x = _ln_ref(x + f, params['ln2_w'][l], params['ln2_b'][l])
    return x.mean(axis=1)


# ---------------------------------- main ---------------------------------------
if __name__ == "__main__":
    key = jax.random.PRNGKey(0)
    k_v, k_a, k_t, k_p = jax.random.split(key, 4)

    B = 2
    video = jax.random.normal(k_v, (B, EMBED_DIM), jnp.float32)
    audio = jax.random.normal(k_a, (B, EMBED_DIM), jnp.float32)
    text = jax.random.normal(k_t, (B, EMBED_DIM), jnp.float32)
    params = init_params(k_p)

    ref = jax.block_until_ready(ref_forward([video, audio, text], params))

    # high-precision f32 MXU-operand mode
    out_f32 = jax.block_until_ready(
        transformer_fusion([video, audio, text], params, matmul_dtype=jnp.float32))
    np.testing.assert_allclose(np.asarray(out_f32), np.asarray(ref), atol=1e-2, rtol=1e-2)
    assert out_f32.shape == (B, EMBED_DIM)

    # default bf16 MXU-operand mode (f32 accumulation, f32 LN/softmax stats)
    out_bf16 = jax.block_until_ready(transformer_fusion([video, audio, text], params))
    np.testing.assert_allclose(np.asarray(out_bf16), np.asarray(ref), atol=5e-2, rtol=5e-2)
    assert out_bf16.shape == (B, EMBED_DIM)

    print("KERNEL_OK")
</pallas_src>

<mosaic_0001>
module attributes {stable_mosaic.version = 11 : i64} {
  func.func @_fusion_kernel(%arg0: i32, %arg1: memref<3x8x32xf32, #tpu.memory_space<vmem>>, %arg2: memref<3x1x32xf32, #tpu.memory_space<vmem>>, %arg3: memref<32x4xf32, #tpu.memory_space<vmem>>, %arg4: memref<4x32xf32, #tpu.memory_space<vmem>>, %arg5: memref<2x3x32x32xf32, #tpu.memory_space<vmem>>, %arg6: memref<2x3x1x32xf32, #tpu.memory_space<vmem>>, %arg7: memref<2x32x32xf32, #tpu.memory_space<vmem>>, %arg8: memref<2x1x32xf32, #tpu.memory_space<vmem>>, %arg9: memref<2x1x32xf32, #tpu.memory_space<vmem>>, %arg10: memref<2x1x32xf32, #tpu.memory_space<vmem>>, %arg11: memref<2x1x32xf32, #tpu.memory_space<vmem>>, %arg12: memref<2x1x32xf32, #tpu.memory_space<vmem>>, %arg13: memref<2x64x32xf32, #tpu.memory_space<vmem>>, %arg14: memref<2x1x64xf32, #tpu.memory_space<vmem>>, %arg15: memref<2x32x64xf32, #tpu.memory_space<vmem>>, %arg16: memref<2x1x32xf32, #tpu.memory_space<vmem>>, %arg17: memref<8x32xf32, #tpu.memory_space<vmem>>) attributes {dimension_semantics = [#tpu.dimension_semantics<parallel>], iteration_bounds = array<i64: 1>, scalar_prefetch = 0 : i64, scratch_operands = 0 : i64, tpu.core_type = #tpu.core_type<tc>, window_params = [{transform_indices = @transform_0, window_bounds = array<i64: 3, 8, 32>}, {pipeline_mode = #tpu.pipeline_mode<synchronous>, transform_indices = @transform_1, window_bounds = array<i64: 3, 1, 32>}, {pipeline_mode = #tpu.pipeline_mode<synchronous>, transform_indices = @transform_2, window_bounds = array<i64: 32, 4>}, {pipeline_mode = #tpu.pipeline_mode<synchronous>, transform_indices = @transform_3, window_bounds = array<i64: 4, 32>}, {pipeline_mode = #tpu.pipeline_mode<synchronous>, transform_indices = @transform_4, window_bounds = array<i64: 2, 3, 32, 32>}, {pipeline_mode = #tpu.pipeline_mode<synchronous>, transform_indices = @transform_5, window_bounds = array<i64: 2, 3, 1, 32>}, {pipeline_mode = #tpu.pipeline_mode<synchronous>, transform_indices = @transform_6, window_bounds = array<i64: 2, 32, 32>}, {pipeline_mode = #tpu.pipeline_mode<synchronous>, transform_indices = @transform_7, window_bounds = array<i64: 2, 1, 32>}, {pipeline_mode = #tpu.pipeline_mode<synchronous>, transform_indices = @transform_8, window_bounds = array<i64: 2, 1, 32>}, {pipeline_mode = #tpu.pipeline_mode<synchronous>, transform_indices = @transform_9, window_bounds = array<i64: 2, 1, 32>}, {pipeline_mode = #tpu.pipeline_mode<synchronous>, transform_indices = @transform_10, window_bounds = array<i64: 2, 1, 32>}, {pipeline_mode = #tpu.pipeline_mode<synchronous>, transform_indices = @transform_11, window_bounds = array<i64: 2, 1, 32>}, {pipeline_mode = #tpu.pipeline_mode<synchronous>, transform_indices = @transform_12, window_bounds = array<i64: 2, 64, 32>}, {pipeline_mode = #tpu.pipeline_mode<synchronous>, transform_indices = @transform_13, window_bounds = array<i64: 2, 1, 64>}, {pipeline_mode = #tpu.pipeline_mode<synchronous>, transform_indices = @transform_14, window_bounds = array<i64: 2, 32, 64>}, {pipeline_mode = #tpu.pipeline_mode<synchronous>, transform_indices = @transform_15, window_bounds = array<i64: 2, 1, 32>}, {transform_indices = @transform_16, window_bounds = array<i64: 8, 32>}]} {
    %c0 = arith.constant 0 : index
    %c0_0 = arith.constant 0 : index
    %0 = vector.load %arg3[%c0, %c0_0] : memref<32x4xf32, #tpu.memory_space<vmem>>, vector<32x4xf32>
    %c0_1 = arith.constant 0 : index
    %c0_2 = arith.constant 0 : index
    %1 = vector.load %arg4[%c0_1, %c0_2] : memref<4x32xf32, #tpu.memory_space<vmem>>, vector<4x32xf32>
    %c0_3 = arith.constant 0 : index
    %c0_4 = arith.constant 0 : index
    %c0_5 = arith.constant 0 : index
    %2 = vector.load %arg1[%c0_3, %c0_4, %c0_5] : memref<3x8x32xf32, #tpu.memory_space<vmem>>, vector<3x8x32xf32>
    %c0_6 = arith.constant 0 : index
    %c0_7 = arith.constant 0 : index
    %c0_8 = arith.constant 0 : index
    %3 = vector.load %arg2[%c0_6, %c0_7, %c0_8] : memref<3x1x32xf32, #tpu.memory_space<vmem>>, vector<3x1x32xf32>
    %4 = vector.broadcast %3 : vector<3x1x32xf32> to vector<3x8x32xf32>
    %5 = arith.addf %2, %4 : vector<3x8x32xf32>
    %6 = vector.shape_cast %5 : vector<3x8x32xf32> to vector<24x32xf32>
    %c0_9 = arith.constant 0 : index
    %c0_10 = arith.constant 0 : index
    %c0_11 = arith.constant 0 : index
    %c0_12 = arith.constant 0 : index
    %7 = vector.load %arg5[%c0_9, %c0_10, %c0_11, %c0_12] : memref<2x3x32x32xf32, #tpu.memory_space<vmem>>, vector<1x1x32x32xf32>
    %8 = vector.shape_cast %7 : vector<1x1x32x32xf32> to vector<32x32xf32>
    %c0_13 = arith.constant 0 : index
    %c0_14 = arith.constant 0 : index
    %c0_15 = arith.constant 0 : index
    %c0_16 = arith.constant 0 : index
    %9 = vector.load %arg6[%c0_13, %c0_14, %c0_15, %c0_16] : memref<2x3x1x32xf32, #tpu.memory_space<vmem>>, vector<1x1x1x32xf32>
    %10 = vector.shape_cast %9 : vector<1x1x1x32xf32> to vector<1x32xf32>
    %cst = arith.constant dense<0.000000e+00> : vector<24x32xf32>
    %11 = tpu.matmul %6, %8, %cst {dimension_numbers = #tpu.dot_dimension_numbers<[1], [1], [0], [0], [0, 0, 1, 0], [], []>} : vector<24x32xf32>, vector<32x32xf32>, vector<24x32xf32> -> vector<24x32xf32>
    %12 = vector.broadcast %10 : vector<1x32xf32> to vector<24x32xf32>
    %13 = arith.addf %11, %12 : vector<24x32xf32>
    %cst_17 = arith.constant 0.353553385 : f32
    %14 = vector.broadcast %cst_17 : f32 to vector<24x32xf32>
    %15 = arith.mulf %13, %14 : vector<24x32xf32>
    %c0_18 = arith.constant 0 : index
    %c1 = arith.constant 1 : index
    %c0_19 = arith.constant 0 : index
    %c0_20 = arith.constant 0 : index
    %16 = vector.load %arg5[%c0_18, %c1, %c0_19, %c0_20] : memref<2x3x32x32xf32, #tpu.memory_space<vmem>>, vector<1x1x32x32xf32>
    %17 = vector.shape_cast %16 : vector<1x1x32x32xf32> to vector<32x32xf32>
    %c0_21 = arith.constant 0 : index
    %c1_22 = arith.constant 1 : index
    %c0_23 = arith.constant 0 : index
    %c0_24 = arith.constant 0 : index
    %18 = vector.load %arg6[%c0_21, %c1_22, %c0_23, %c0_24] : memref<2x3x1x32xf32, #tpu.memory_space<vmem>>, vector<1x1x1x32xf32>
    %19 = vector.shape_cast %18 : vector<1x1x1x32xf32> to vector<1x32xf32>
    %cst_25 = arith.constant dense<0.000000e+00> : vector<24x32xf32>
    %20 = tpu.matmul %6, %17, %cst_25 {dimension_numbers = #tpu.dot_dimension_numbers<[1], [1], [0], [0], [0, 0, 1, 0], [], []>} : vector<24x32xf32>, vector<32x32xf32>, vector<24x32xf32> -> vector<24x32xf32>
    %21 = vector.broadcast %19 : vector<1x32xf32> to vector<24x32xf32>
    %22 = arith.addf %20, %21 : vector<24x32xf32>
    %c0_26 = arith.constant 0 : index
    %c2 = arith.constant 2 : index
    %c0_27 = arith.constant 0 : index
    %c0_28 = arith.constant 0 : index
    %23 = vector.load %arg5[%c0_26, %c2, %c0_27, %c0_28] : memref<2x3x32x32xf32, #tpu.memory_space<vmem>>, vector<1x1x32x32xf32>
    %24 = vector.shape_cast %23 : vector<1x1x32x32xf32> to vector<32x32xf32>
    %c0_29 = arith.constant 0 : index
    %c2_30 = arith.constant 2 : index
    %c0_31 = arith.constant 0 : index
    %c0_32 = arith.constant 0 : index
    %25 = vector.load %arg6[%c0_29, %c2_30, %c0_31, %c0_32] : memref<2x3x1x32xf32, #tpu.memory_space<vmem>>, vector<1x1x1x32xf32>
    %26 = vector.shape_cast %25 : vector<1x1x1x32xf32> to vector<1x32xf32>
    %cst_33 = arith.constant dense<0.000000e+00> : vector<24x32xf32>
    %27 = tpu.matmul %6, %24, %cst_33 {dimension_numbers = #tpu.dot_dimension_numbers<[1], [1], [0], [0], [0, 0, 1, 0], [], []>} : vector<24x32xf32>, vector<32x32xf32>, vector<24x32xf32> -> vector<24x32xf32>
    %28 = vector.broadcast %26 : vector<1x32xf32> to vector<24x32xf32>
    %29 = arith.addf %27, %28 : vector<24x32xf32>
    %30 = vector.extract_strided_slice %15 {offsets = [0, 0], sizes = [8, 32], strides = [1, 1]} : vector<24x32xf32> to vector<8x32xf32>
    %31 = vector.extract_strided_slice %22 {offsets = [0, 0], sizes = [8, 32], strides = [1, 1]} : vector<24x32xf32> to vector<8x32xf32>
    %32 = arith.mulf %30, %31 : vector<8x32xf32>
    %33 = vector.extract_strided_slice %15 {offsets = [0, 0], sizes = [8, 32], strides = [1, 1]} : vector<24x32xf32> to vector<8x32xf32>
    %34 = vector.extract_strided_slice %22 {offsets = [8, 0], sizes = [8, 32], strides = [1, 1]} : vector<24x32xf32> to vector<8x32xf32>
    %35 = arith.mulf %33, %34 : vector<8x32xf32>
    %36 = vector.extract_strided_slice %15 {offsets = [0, 0], sizes = [8, 32], strides = [1, 1]} : vector<24x32xf32> to vector<8x32xf32>
    %37 = vector.extract_strided_slice %22 {offsets = [16, 0], sizes = [8, 32], strides = [1, 1]} : vector<24x32xf32> to vector<8x32xf32>
    %38 = arith.mulf %36, %37 : vector<8x32xf32>
    %39 = vector.extract_strided_slice %15 {offsets = [8, 0], sizes = [8, 32], strides = [1, 1]} : vector<24x32xf32> to vector<8x32xf32>
    %40 = vector.extract_strided_slice %22 {offsets = [0, 0], sizes = [8, 32], strides = [1, 1]} : vector<24x32xf32> to vector<8x32xf32>
    %41 = arith.mulf %39, %40 : vector<8x32xf32>
    %42 = vector.extract_strided_slice %15 {offsets = [8, 0], sizes = [8, 32], strides = [1, 1]} : vector<24x32xf32> to vector<8x32xf32>
    %43 = vector.extract_strided_slice %22 {offsets = [8, 0], sizes = [8, 32], strides = [1, 1]} : vector<24x32xf32> to vector<8x32xf32>
    %44 = arith.mulf %42, %43 : vector<8x32xf32>
    %45 = vector.extract_strided_slice %15 {offsets = [8, 0], sizes = [8, 32], strides = [1, 1]} : vector<24x32xf32> to vector<8x32xf32>
    %46 = vector.extract_strided_slice %22 {offsets = [16, 0], sizes = [8, 32], strides = [1, 1]} : vector<24x32xf32> to vector<8x32xf32>
    %47 = arith.mulf %45, %46 : vector<8x32xf32>
    %48 = vector.extract_strided_slice %15 {offsets = [16, 0], sizes = [8, 32], strides = [1, 1]} : vector<24x32xf32> to vector<8x32xf32>
    %49 = vector.extract_strided_slice %22 {offsets = [0, 0], sizes = [8, 32], strides = [1, 1]} : vector<24x32xf32> to vector<8x32xf32>
    %50 = arith.mulf %48, %49 : vector<8x32xf32>
    %51 = vector.extract_strided_slice %15 {offsets = [16, 0], sizes = [8, 32], strides = [1, 1]} : vector<24x32xf32> to vector<8x32xf32>
    %52 = vector.extract_strided_slice %22 {offsets = [8, 0], sizes = [8, 32], strides = [1, 1]} : vector<24x32xf32> to vector<8x32xf32>
    %53 = arith.mulf %51, %52 : vector<8x32xf32>
    %54 = vector.extract_strided_slice %15 {offsets = [16, 0], sizes = [8, 32], strides = [1, 1]} : vector<24x32xf32> to vector<8x32xf32>
    %55 = vector.extract_strided_slice %22 {offsets = [16, 0], sizes = [8, 32], strides = [1, 1]} : vector<24x32xf32> to vector<8x32xf32>
    %56 = arith.mulf %54, %55 : vector<8x32xf32>
    %57 = tpu.concatenate %32, %35, %38, %41, %44, %47, %50, %53, %56 in 0 : vector<8x32xf32>, vector<8x32xf32>, vector<8x32xf32>, vector<8x32xf32>, vector<8x32xf32>, vector<8x32xf32>, vector<8x32xf32>, vector<8x32xf32>, vector<8x32xf32> -> vector<72x32xf32>
    %cst_34 = arith.constant dense<0.000000e+00> : vector<72x4xf32>
    %58 = tpu.matmul %57, %0, %cst_34 {dimension_numbers = #tpu.dot_dimension_numbers<[1], [0], [0], [1], [0, 0, 1, 1], [], []>} : vector<72x32xf32>, vector<32x4xf32>, vector<72x4xf32> -> vector<72x4xf32>
    %59 = vector.extract_strided_slice %58 {offsets = [0, 0], sizes = [8, 4], strides = [1, 1]} : vector<72x4xf32> to vector<8x4xf32>
    %60 = vector.extract_strided_slice %58 {offsets = [8, 0], sizes = [8, 4], strides = [1, 1]} : vector<72x4xf32> to vector<8x4xf32>
    %61 = vector.extract_strided_slice %58 {offsets = [16, 0], sizes = [8, 4], strides = [1, 1]} : vector<72x4xf32> to vector<8x4xf32>
    %62 = arith.maximumf %59, %60 : vector<8x4xf32>
    %63 = arith.maximumf %62, %61 : vector<8x4xf32>
    %64 = arith.subf %59, %63 : vector<8x4xf32>
    %65 = math.exp %64 : vector<8x4xf32>
    %66 = arith.subf %60, %63 : vector<8x4xf32>
    %67 = math.exp %66 : vector<8x4xf32>
    %68 = arith.subf %61, %63 : vector<8x4xf32>
    %69 = math.exp %68 : vector<8x4xf32>
    %70 = arith.addf %65, %67 : vector<8x4xf32>
    %71 = arith.addf %70, %69 : vector<8x4xf32>
    %72 = tpu.reciprocal %71 {approx = true} : vector<8x4xf32> -> vector<8x4xf32>
    %73 = arith.mulf %65, %72 : vector<8x4xf32>
    %74 = arith.mulf %67, %72 : vector<8x4xf32>
    %75 = arith.mulf %69, %72 : vector<8x4xf32>
    %76 = vector.extract_strided_slice %58 {offsets = [24, 0], sizes = [8, 4], strides = [1, 1]} : vector<72x4xf32> to vector<8x4xf32>
    %77 = vector.extract_strided_slice %58 {offsets = [32, 0], sizes = [8, 4], strides = [1, 1]} : vector<72x4xf32> to vector<8x4xf32>
    %78 = vector.extract_strided_slice %58 {offsets = [40, 0], sizes = [8, 4], strides = [1, 1]} : vector<72x4xf32> to vector<8x4xf32>
    %79 = arith.maximumf %76, %77 : vector<8x4xf32>
    %80 = arith.maximumf %79, %78 : vector<8x4xf32>
    %81 = arith.subf %76, %80 : vector<8x4xf32>
    %82 = math.exp %81 : vector<8x4xf32>
    %83 = arith.subf %77, %80 : vector<8x4xf32>
    %84 = math.exp %83 : vector<8x4xf32>
    %85 = arith.subf %78, %80 : vector<8x4xf32>
    %86 = math.exp %85 : vector<8x4xf32>
    %87 = arith.addf %82, %84 : vector<8x4xf32>
    %88 = arith.addf %87, %86 : vector<8x4xf32>
    %89 = tpu.reciprocal %88 {approx = true} : vector<8x4xf32> -> vector<8x4xf32>
    %90 = arith.mulf %82, %89 : vector<8x4xf32>
    %91 = arith.mulf %84, %89 : vector<8x4xf32>
    %92 = arith.mulf %86, %89 : vector<8x4xf32>
    %93 = vector.extract_strided_slice %58 {offsets = [48, 0], sizes = [8, 4], strides = [1, 1]} : vector<72x4xf32> to vector<8x4xf32>
    %94 = vector.extract_strided_slice %58 {offsets = [56, 0], sizes = [8, 4], strides = [1, 1]} : vector<72x4xf32> to vector<8x4xf32>
    %95 = vector.extract_strided_slice %58 {offsets = [64, 0], sizes = [8, 4], strides = [1, 1]} : vector<72x4xf32> to vector<8x4xf32>
    %96 = arith.maximumf %93, %94 : vector<8x4xf32>
    %97 = arith.maximumf %96, %95 : vector<8x4xf32>
    %98 = arith.subf %93, %97 : vector<8x4xf32>
    %99 = math.exp %98 : vector<8x4xf32>
    %100 = arith.subf %94, %97 : vector<8x4xf32>
    %101 = math.exp %100 : vector<8x4xf32>
    %102 = arith.subf %95, %97 : vector<8x4xf32>
    %103 = math.exp %102 : vector<8x4xf32>
    %104 = arith.addf %99, %101 : vector<8x4xf32>
    %105 = arith.addf %104, %103 : vector<8x4xf32>
    %106 = tpu.reciprocal %105 {approx = true} : vector<8x4xf32> -> vector<8x4xf32>
    %107 = arith.mulf %99, %106 : vector<8x4xf32>
    %108 = arith.mulf %101, %106 : vector<8x4xf32>
    %109 = arith.mulf %103, %106 : vector<8x4xf32>
    %110 = tpu.concatenate %73, %74, %75, %90, %91, %92, %107, %108, %109 in 0 : vector<8x4xf32>, vector<8x4xf32>, vector<8x4xf32>, vector<8x4xf32>, vector<8x4xf32>, vector<8x4xf32>, vector<8x4xf32>, vector<8x4xf32>, vector<8x4xf32> -> vector<72x4xf32>
    %cst_35 = arith.constant dense<0.000000e+00> : vector<72x32xf32>
    %111 = tpu.matmul %110, %1, %cst_35 {dimension_numbers = #tpu.dot_dimension_numbers<[1], [0], [0], [1], [0, 0, 1, 1], [], []>} : vector<72x4xf32>, vector<4x32xf32>, vector<72x32xf32> -> vector<72x32xf32>
    %112 = tpu.concatenate %29, %29, %29 in 0 : vector<24x32xf32>, vector<24x32xf32>, vector<24x32xf32> -> vector<72x32xf32>
    %113 = arith.mulf %111, %112 : vector<72x32xf32>
    %114 = vector.extract_strided_slice %113 {offsets = [0, 0], sizes = [8, 32], strides = [1, 1]} : vector<72x32xf32> to vector<8x32xf32>
    %115 = vector.extract_strided_slice %113 {offsets = [8, 0], sizes = [8, 32], strides = [1, 1]} : vector<72x32xf32> to vector<8x32xf32>
    %116 = vector.extract_strided_slice %113 {offsets = [16, 0], sizes = [8, 32], strides = [1, 1]} : vector<72x32xf32> to vector<8x32xf32>
    %117 = arith.addf %114, %115 : vector<8x32xf32>
    %118 = arith.addf %117, %116 : vector<8x32xf32>
    %119 = vector.extract_strided_slice %113 {offsets = [24, 0], sizes = [8, 32], strides = [1, 1]} : vector<72x32xf32> to vector<8x32xf32>
    %120 = vector.extract_strided_slice %113 {offsets = [32, 0], sizes = [8, 32], strides = [1, 1]} : vector<72x32xf32> to vector<8x32xf32>
    %121 = vector.extract_strided_slice %113 {offsets = [40, 0], sizes = [8, 32], strides = [1, 1]} : vector<72x32xf32> to vector<8x32xf32>
    %122 = arith.addf %119, %120 : vector<8x32xf32>
    %123 = arith.addf %122, %121 : vector<8x32xf32>
    %124 = vector.extract_strided_slice %113 {offsets = [48, 0], sizes = [8, 32], strides = [1, 1]} : vector<72x32xf32> to vector<8x32xf32>
    %125 = vector.extract_strided_slice %113 {offsets = [56, 0], sizes = [8, 32], strides = [1, 1]} : vector<72x32xf32> to vector<8x32xf32>
    %126 = vector.extract_strided_slice %113 {offsets = [64, 0], sizes = [8, 32], strides = [1, 1]} : vector<72x32xf32> to vector<8x32xf32>
    %127 = arith.addf %124, %125 : vector<8x32xf32>
    %128 = arith.addf %127, %126 : vector<8x32xf32>
    %129 = tpu.concatenate %118, %123, %128 in 0 : vector<8x32xf32>, vector<8x32xf32>, vector<8x32xf32> -> vector<24x32xf32>
    %c0_36 = arith.constant 0 : index
    %c0_37 = arith.constant 0 : index
    %c0_38 = arith.constant 0 : index
    %130 = vector.load %arg7[%c0_36, %c0_37, %c0_38] : memref<2x32x32xf32, #tpu.memory_space<vmem>>, vector<1x32x32xf32>
    %131 = vector.shape_cast %130 : vector<1x32x32xf32> to vector<32x32xf32>
    %c0_39 = arith.constant 0 : index
    %c0_40 = arith.constant 0 : index
    %c0_41 = arith.constant 0 : index
    %132 = vector.load %arg8[%c0_39, %c0_40, %c0_41] : memref<2x1x32xf32, #tpu.memory_space<vmem>>, vector<1x1x32xf32>
    %133 = vector.shape_cast %132 : vector<1x1x32xf32> to vector<1x32xf32>
    %cst_42 = arith.constant dense<0.000000e+00> : vector<24x32xf32>
    %134 = tpu.matmul %129, %131, %cst_42 {dimension_numbers = #tpu.dot_dimension_numbers<[1], [1], [0], [0], [0, 0, 1, 0], [], []>} : vector<24x32xf32>, vector<32x32xf32>, vector<24x32xf32> -> vector<24x32xf32>
    %135 = vector.broadcast %133 : vector<1x32xf32> to vector<24x32xf32>
    %136 = arith.addf %134, %135 : vector<24x32xf32>
    %137 = arith.addf %6, %136 : vector<24x32xf32>
    %c0_43 = arith.constant 0 : index
    %c0_44 = arith.constant 0 : index
    %c0_45 = arith.constant 0 : index
    %138 = vector.load %arg9[%c0_43, %c0_44, %c0_45] : memref<2x1x32xf32, #tpu.memory_space<vmem>>, vector<1x1x32xf32>
    %139 = vector.shape_cast %138 : vector<1x1x32xf32> to vector<1x32xf32>
    %c0_46 = arith.constant 0 : index
    %c0_47 = arith.constant 0 : index
    %c0_48 = arith.constant 0 : index
    %140 = vector.load %arg10[%c0_46, %c0_47, %c0_48] : memref<2x1x32xf32, #tpu.memory_space<vmem>>, vector<1x1x32xf32>
    %141 = vector.shape_cast %140 : vector<1x1x32xf32> to vector<1x32xf32>
    %cst_49 = arith.constant dense<0.000000e+00> : vector<24xf32>
    %142 = vector.multi_reduction <add>, %137, %cst_49 [1] : vector<24x32xf32> to vector<24xf32>
    %143 = vector.shape_cast %142 : vector<24xf32> to vector<24x1xf32>
    %cst_50 = arith.constant 3.200000e+01 : f32
    %144 = vector.broadcast %cst_50 : f32 to vector<24x1xf32>
    %145 = arith.divf %143, %144 : vector<24x1xf32>
    %146 = vector.broadcast %145 : vector<24x1xf32> to vector<24x32xf32>
    %147 = arith.subf %137, %146 : vector<24x32xf32>
    %148 = arith.mulf %147, %147 : vector<24x32xf32>
    %cst_51 = arith.constant dense<0.000000e+00> : vector<24xf32>
    %149 = vector.multi_reduction <add>, %148, %cst_51 [1] : vector<24x32xf32> to vector<24xf32>
    %150 = vector.shape_cast %149 : vector<24xf32> to vector<24x1xf32>
    %cst_52 = arith.constant 3.200000e+01 : f32
    %151 = vector.broadcast %cst_52 : f32 to vector<24x1xf32>
    %152 = arith.divf %150, %151 : vector<24x1xf32>
    %cst_53 = arith.constant 9.99999974E-6 : f32
    %153 = vector.broadcast %cst_53 : f32 to vector<24x1xf32>
    %154 = arith.addf %152, %153 : vector<24x1xf32>
    %155 = math.rsqrt %154 : vector<24x1xf32>
    %156 = vector.broadcast %155 : vector<24x1xf32> to vector<24x32xf32>
    %157 = arith.mulf %147, %156 : vector<24x32xf32>
    %158 = vector.broadcast %139 : vector<1x32xf32> to vector<24x32xf32>
    %159 = arith.mulf %157, %158 : vector<24x32xf32>
    %160 = vector.broadcast %141 : vector<1x32xf32> to vector<24x32xf32>
    %161 = arith.addf %159, %160 : vector<24x32xf32>
    %c0_54 = arith.constant 0 : index
    %c0_55 = arith.constant 0 : index
    %c0_56 = arith.constant 0 : index
    %162 = vector.load %arg13[%c0_54, %c0_55, %c0_56] : memref<2x64x32xf32, #tpu.memory_space<vmem>>, vector<1x64x32xf32>
    %163 = vector.shape_cast %162 : vector<1x64x32xf32> to vector<64x32xf32>
    %c0_57 = arith.constant 0 : index
    %c0_58 = arith.constant 0 : index
    %c0_59 = arith.constant 0 : index
    %164 = vector.load %arg14[%c0_57, %c0_58, %c0_59] : memref<2x1x64xf32, #tpu.memory_space<vmem>>, vector<1x1x64xf32>
    %165 = vector.shape_cast %164 : vector<1x1x64xf32> to vector<1x64xf32>
    %cst_60 = arith.constant dense<0.000000e+00> : vector<24x64xf32>
    %166 = tpu.matmul %161, %163, %cst_60 {dimension_numbers = #tpu.dot_dimension_numbers<[1], [1], [0], [0], [0, 0, 1, 0], [], []>} : vector<24x32xf32>, vector<64x32xf32>, vector<24x64xf32> -> vector<24x64xf32>
    %167 = vector.broadcast %165 : vector<1x64xf32> to vector<24x64xf32>
    %168 = arith.addf %166, %167 : vector<24x64xf32>
    %cst_61 = arith.constant 0.000000e+00 : f32
    %169 = vector.broadcast %cst_61 : f32 to vector<24x64xf32>
    %170 = arith.maximumf %168, %169 : vector<24x64xf32>
    %c0_62 = arith.constant 0 : index
    %c0_63 = arith.constant 0 : index
    %c0_64 = arith.constant 0 : index
    %171 = vector.load %arg15[%c0_62, %c0_63, %c0_64] : memref<2x32x64xf32, #tpu.memory_space<vmem>>, vector<1x32x64xf32>
    %172 = vector.shape_cast %171 : vector<1x32x64xf32> to vector<32x64xf32>
    %c0_65 = arith.constant 0 : index
    %c0_66 = arith.constant 0 : index
    %c0_67 = arith.constant 0 : index
    %173 = vector.load %arg16[%c0_65, %c0_66, %c0_67] : memref<2x1x32xf32, #tpu.memory_space<vmem>>, vector<1x1x32xf32>
    %174 = vector.shape_cast %173 : vector<1x1x32xf32> to vector<1x32xf32>
    %cst_68 = arith.constant dense<0.000000e+00> : vector<24x32xf32>
    %175 = tpu.matmul %170, %172, %cst_68 {dimension_numbers = #tpu.dot_dimension_numbers<[1], [1], [0], [0], [0, 0, 1, 0], [], []>} : vector<24x64xf32>, vector<32x64xf32>, vector<24x32xf32> -> vector<24x32xf32>
    %176 = vector.broadcast %174 : vector<1x32xf32> to vector<24x32xf32>
    %177 = arith.addf %175, %176 : vector<24x32xf32>
    %178 = arith.addf %161, %177 : vector<24x32xf32>
    %c0_69 = arith.constant 0 : index
    %c0_70 = arith.constant 0 : index
    %c0_71 = arith.constant 0 : index
    %179 = vector.load %arg11[%c0_69, %c0_70, %c0_71] : memref<2x1x32xf32, #tpu.memory_space<vmem>>, vector<1x1x32xf32>
    %180 = vector.shape_cast %179 : vector<1x1x32xf32> to vector<1x32xf32>
    %c0_72 = arith.constant 0 : index
    %c0_73 = arith.constant 0 : index
    %c0_74 = arith.constant 0 : index
    %181 = vector.load %arg12[%c0_72, %c0_73, %c0_74] : memref<2x1x32xf32, #tpu.memory_space<vmem>>, vector<1x1x32xf32>
    %182 = vector.shape_cast %181 : vector<1x1x32xf32> to vector<1x32xf32>
    %cst_75 = arith.constant dense<0.000000e+00> : vector<24xf32>
    %183 = vector.multi_reduction <add>, %178, %cst_75 [1] : vector<24x32xf32> to vector<24xf32>
    %184 = vector.shape_cast %183 : vector<24xf32> to vector<24x1xf32>
    %cst_76 = arith.constant 3.200000e+01 : f32
    %185 = vector.broadcast %cst_76 : f32 to vector<24x1xf32>
    %186 = arith.divf %184, %185 : vector<24x1xf32>
    %187 = vector.broadcast %186 : vector<24x1xf32> to vector<24x32xf32>
    %188 = arith.subf %178, %187 : vector<24x32xf32>
    %189 = arith.mulf %188, %188 : vector<24x32xf32>
    %cst_77 = arith.constant dense<0.000000e+00> : vector<24xf32>
    %190 = vector.multi_reduction <add>, %189, %cst_77 [1] : vector<24x32xf32> to vector<24xf32>
    %191 = vector.shape_cast %190 : vector<24xf32> to vector<24x1xf32>
    %cst_78 = arith.constant 3.200000e+01 : f32
    %192 = vector.broadcast %cst_78 : f32 to vector<24x1xf32>
    %193 = arith.divf %191, %192 : vector<24x1xf32>
    %cst_79 = arith.constant 9.99999974E-6 : f32
    %194 = vector.broadcast %cst_79 : f32 to vector<24x1xf32>
    %195 = arith.addf %193, %194 : vector<24x1xf32>
    %196 = math.rsqrt %195 : vector<24x1xf32>
    %197 = vector.broadcast %196 : vector<24x1xf32> to vector<24x32xf32>
    %198 = arith.mulf %188, %197 : vector<24x32xf32>
    %199 = vector.broadcast %180 : vector<1x32xf32> to vector<24x32xf32>
    %200 = arith.mulf %198, %199 : vector<24x32xf32>
    %201 = vector.broadcast %182 : vector<1x32xf32> to vector<24x32xf32>
    %202 = arith.addf %200, %201 : vector<24x32xf32>
    %c1_80 = arith.constant 1 : index
    %c0_81 = arith.constant 0 : index
    %c0_82 = arith.constant 0 : index
    %c0_83 = arith.constant 0 : index
    %203 = vector.load %arg5[%c1_80, %c0_81, %c0_82, %c0_83] : memref<2x3x32x32xf32, #tpu.memory_space<vmem>>, vector<1x1x32x32xf32>
    %204 = vector.shape_cast %203 : vector<1x1x32x32xf32> to vector<32x32xf32>
    %c1_84 = arith.constant 1 : index
    %c0_85 = arith.constant 0 : index
    %c0_86 = arith.constant 0 : index
    %c0_87 = arith.constant 0 : index
    %205 = vector.load %arg6[%c1_84, %c0_85, %c0_86, %c0_87] : memref<2x3x1x32xf32, #tpu.memory_space<vmem>>, vector<1x1x1x32xf32>
    %206 = vector.shape_cast %205 : vector<1x1x1x32xf32> to vector<1x32xf32>
    %cst_88 = arith.constant dense<0.000000e+00> : vector<24x32xf32>
    %207 = tpu.matmul %202, %204, %cst_88 {dimension_numbers = #tpu.dot_dimension_numbers<[1], [1], [0], [0], [0, 0, 1, 0], [], []>} : vector<24x32xf32>, vector<32x32xf32>, vector<24x32xf32> -> vector<24x32xf32>
    %208 = vector.broadcast %206 : vector<1x32xf32> to vector<24x32xf32>
    %209 = arith.addf %207, %208 : vector<24x32xf32>
    %cst_89 = arith.constant 0.353553385 : f32
    %210 = vector.broadcast %cst_89 : f32 to vector<24x32xf32>
    %211 = arith.mulf %209, %210 : vector<24x32xf32>
    %c1_90 = arith.constant 1 : index
    %c1_91 = arith.constant 1 : index
    %c0_92 = arith.constant 0 : index
    %c0_93 = arith.constant 0 : index
    %212 = vector.load %arg5[%c1_90, %c1_91, %c0_92, %c0_93] : memref<2x3x32x32xf32, #tpu.memory_space<vmem>>, vector<1x1x32x32xf32>
    %213 = vector.shape_cast %212 : vector<1x1x32x32xf32> to vector<32x32xf32>
    %c1_94 = arith.constant 1 : index
    %c1_95 = arith.constant 1 : index
    %c0_96 = arith.constant 0 : index
    %c0_97 = arith.constant 0 : index
    %214 = vector.load %arg6[%c1_94, %c1_95, %c0_96, %c0_97] : memref<2x3x1x32xf32, #tpu.memory_space<vmem>>, vector<1x1x1x32xf32>
    %215 = vector.shape_cast %214 : vector<1x1x1x32xf32> to vector<1x32xf32>
    %cst_98 = arith.constant dense<0.000000e+00> : vector<24x32xf32>
    %216 = tpu.matmul %202, %213, %cst_98 {dimension_numbers = #tpu.dot_dimension_numbers<[1], [1], [0], [0], [0, 0, 1, 0], [], []>} : vector<24x32xf32>, vector<32x32xf32>, vector<24x32xf32> -> vector<24x32xf32>
    %217 = vector.broadcast %215 : vector<1x32xf32> to vector<24x32xf32>
    %218 = arith.addf %216, %217 : vector<24x32xf32>
    %c1_99 = arith.constant 1 : index
    %c2_100 = arith.constant 2 : index
    %c0_101 = arith.constant 0 : index
    %c0_102 = arith.constant 0 : index
    %219 = vector.load %arg5[%c1_99, %c2_100, %c0_101, %c0_102] : memref<2x3x32x32xf32, #tpu.memory_space<vmem>>, vector<1x1x32x32xf32>
    %220 = vector.shape_cast %219 : vector<1x1x32x32xf32> to vector<32x32xf32>
    %c1_103 = arith.constant 1 : index
    %c2_104 = arith.constant 2 : index
    %c0_105 = arith.constant 0 : index
    %c0_106 = arith.constant 0 : index
    %221 = vector.load %arg6[%c1_103, %c2_104, %c0_105, %c0_106] : memref<2x3x1x32xf32, #tpu.memory_space<vmem>>, vector<1x1x1x32xf32>
    %222 = vector.shape_cast %221 : vector<1x1x1x32xf32> to vector<1x32xf32>
    %cst_107 = arith.constant dense<0.000000e+00> : vector<24x32xf32>
    %223 = tpu.matmul %202, %220, %cst_107 {dimension_numbers = #tpu.dot_dimension_numbers<[1], [1], [0], [0], [0, 0, 1, 0], [], []>} : vector<24x32xf32>, vector<32x32xf32>, vector<24x32xf32> -> vector<24x32xf32>
    %224 = vector.broadcast %222 : vector<1x32xf32> to vector<24x32xf32>
    %225 = arith.addf %223, %224 : vector<24x32xf32>
    %226 = vector.extract_strided_slice %211 {offsets = [0, 0], sizes = [8, 32], strides = [1, 1]} : vector<24x32xf32> to vector<8x32xf32>
    %227 = vector.extract_strided_slice %218 {offsets = [0, 0], sizes = [8, 32], strides = [1, 1]} : vector<24x32xf32> to vector<8x32xf32>
    %228 = arith.mulf %226, %227 : vector<8x32xf32>
    %229 = vector.extract_strided_slice %211 {offsets = [0, 0], sizes = [8, 32], strides = [1, 1]} : vector<24x32xf32> to vector<8x32xf32>
    %230 = vector.extract_strided_slice %218 {offsets = [8, 0], sizes = [8, 32], strides = [1, 1]} : vector<24x32xf32> to vector<8x32xf32>
    %231 = arith.mulf %229, %230 : vector<8x32xf32>
    %232 = vector.extract_strided_slice %211 {offsets = [0, 0], sizes = [8, 32], strides = [1, 1]} : vector<24x32xf32> to vector<8x32xf32>
    %233 = vector.extract_strided_slice %218 {offsets = [16, 0], sizes = [8, 32], strides = [1, 1]} : vector<24x32xf32> to vector<8x32xf32>
    %234 = arith.mulf %232, %233 : vector<8x32xf32>
    %235 = vector.extract_strided_slice %211 {offsets = [8, 0], sizes = [8, 32], strides = [1, 1]} : vector<24x32xf32> to vector<8x32xf32>
    %236 = vector.extract_strided_slice %218 {offsets = [0, 0], sizes = [8, 32], strides = [1, 1]} : vector<24x32xf32> to vector<8x32xf32>
    %237 = arith.mulf %235, %236 : vector<8x32xf32>
    %238 = vector.extract_strided_slice %211 {offsets = [8, 0], sizes = [8, 32], strides = [1, 1]} : vector<24x32xf32> to vector<8x32xf32>
    %239 = vector.extract_strided_slice %218 {offsets = [8, 0], sizes = [8, 32], strides = [1, 1]} : vector<24x32xf32> to vector<8x32xf32>
    %240 = arith.mulf %238, %239 : vector<8x32xf32>
    %241 = vector.extract_strided_slice %211 {offsets = [8, 0], sizes = [8, 32], strides = [1, 1]} : vector<24x32xf32> to vector<8x32xf32>
    %242 = vector.extract_strided_slice %218 {offsets = [16, 0], sizes = [8, 32], strides = [1, 1]} : vector<24x32xf32> to vector<8x32xf32>
    %243 = arith.mulf %241, %242 : vector<8x32xf32>
    %244 = vector.extract_strided_slice %211 {offsets = [16, 0], sizes = [8, 32], strides = [1, 1]} : vector<24x32xf32> to vector<8x32xf32>
    %245 = vector.extract_strided_slice %218 {offsets = [0, 0], sizes = [8, 32], strides = [1, 1]} : vector<24x32xf32> to vector<8x32xf32>
    %246 = arith.mulf %244, %245 : vector<8x32xf32>
    %247 = vector.extract_strided_slice %211 {offsets = [16, 0], sizes = [8, 32], strides = [1, 1]} : vector<24x32xf32> to vector<8x32xf32>
    %248 = vector.extract_strided_slice %218 {offsets = [8, 0], sizes = [8, 32], strides = [1, 1]} : vector<24x32xf32> to vector<8x32xf32>
    %249 = arith.mulf %247, %248 : vector<8x32xf32>
    %250 = vector.extract_strided_slice %211 {offsets = [16, 0], sizes = [8, 32], strides = [1, 1]} : vector<24x32xf32> to vector<8x32xf32>
    %251 = vector.extract_strided_slice %218 {offsets = [16, 0], sizes = [8, 32], strides = [1, 1]} : vector<24x32xf32> to vector<8x32xf32>
    %252 = arith.mulf %250, %251 : vector<8x32xf32>
    %253 = tpu.concatenate %228, %231, %234, %237, %240, %243, %246, %249, %252 in 0 : vector<8x32xf32>, vector<8x32xf32>, vector<8x32xf32>, vector<8x32xf32>, vector<8x32xf32>, vector<8x32xf32>, vector<8x32xf32>, vector<8x32xf32>, vector<8x32xf32> -> vector<72x32xf32>
    %cst_108 = arith.constant dense<0.000000e+00> : vector<72x4xf32>
    %254 = tpu.matmul %253, %0, %cst_108 {dimension_numbers = #tpu.dot_dimension_numbers<[1], [0], [0], [1], [0, 0, 1, 1], [], []>} : vector<72x32xf32>, vector<32x4xf32>, vector<72x4xf32> -> vector<72x4xf32>
    %255 = vector.extract_strided_slice %254 {offsets = [0, 0], sizes = [8, 4], strides = [1, 1]} : vector<72x4xf32> to vector<8x4xf32>
    %256 = vector.extract_strided_slice %254 {offsets = [8, 0], sizes = [8, 4], strides = [1, 1]} : vector<72x4xf32> to vector<8x4xf32>
    %257 = vector.extract_strided_slice %254 {offsets = [16, 0], sizes = [8, 4], strides = [1, 1]} : vector<72x4xf32> to vector<8x4xf32>
    %258 = arith.maximumf %255, %256 : vector<8x4xf32>
    %259 = arith.maximumf %258, %257 : vector<8x4xf32>
    %260 = arith.subf %255, %259 : vector<8x4xf32>
    %261 = math.exp %260 : vector<8x4xf32>
    %262 = arith.subf %256, %259 : vector<8x4xf32>
    %263 = math.exp %262 : vector<8x4xf32>
    %264 = arith.subf %257, %259 : vector<8x4xf32>
    %265 = math.exp %264 : vector<8x4xf32>
    %266 = arith.addf %261, %263 : vector<8x4xf32>
    %267 = arith.addf %266, %265 : vector<8x4xf32>
    %268 = tpu.reciprocal %267 {approx = true} : vector<8x4xf32> -> vector<8x4xf32>
    %269 = arith.mulf %261, %268 : vector<8x4xf32>
    %270 = arith.mulf %263, %268 : vector<8x4xf32>
    %271 = arith.mulf %265, %268 : vector<8x4xf32>
    %272 = vector.extract_strided_slice %254 {offsets = [24, 0], sizes = [8, 4], strides = [1, 1]} : vector<72x4xf32> to vector<8x4xf32>
    %273 = vector.extract_strided_slice %254 {offsets = [32, 0], sizes = [8, 4], strides = [1, 1]} : vector<72x4xf32> to vector<8x4xf32>
    %274 = vector.extract_strided_slice %254 {offsets = [40, 0], sizes = [8, 4], strides = [1, 1]} : vector<72x4xf32> to vector<8x4xf32>
    %275 = arith.maximumf %272, %273 : vector<8x4xf32>
    %276 = arith.maximumf %275, %274 : vector<8x4xf32>
    %277 = arith.subf %272, %276 : vector<8x4xf32>
    %278 = math.exp %277 : vector<8x4xf32>
    %279 = arith.subf %273, %276 : vector<8x4xf32>
    %280 = math.exp %279 : vector<8x4xf32>
    %281 = arith.subf %274, %276 : vector<8x4xf32>
    %282 = math.exp %281 : vector<8x4xf32>
    %283 = arith.addf %278, %280 : vector<8x4xf32>
    %284 = arith.addf %283, %282 : vector<8x4xf32>
    %285 = tpu.reciprocal %284 {approx = true} : vector<8x4xf32> -> vector<8x4xf32>
    %286 = arith.mulf %278, %285 : vector<8x4xf32>
    %287 = arith.mulf %280, %285 : vector<8x4xf32>
    %288 = arith.mulf %282, %285 : vector<8x4xf32>
    %289 = vector.extract_strided_slice %254 {offsets = [48, 0], sizes = [8, 4], strides = [1, 1]} : vector<72x4xf32> to vector<8x4xf32>
    %290 = vector.extract_strided_slice %254 {offsets = [56, 0], sizes = [8, 4], strides = [1, 1]} : vector<72x4xf32> to vector<8x4xf32>
    %291 = vector.extract_strided_slice %254 {offsets = [64, 0], sizes = [8, 4], strides = [1, 1]} : vector<72x4xf32> to vector<8x4xf32>
    %292 = arith.maximumf %289, %290 : vector<8x4xf32>
    %293 = arith.maximumf %292, %291 : vector<8x4xf32>
    %294 = arith.subf %289, %293 : vector<8x4xf32>
    %295 = math.exp %294 : vector<8x4xf32>
    %296 = arith.subf %290, %293 : vector<8x4xf32>
    %297 = math.exp %296 : vector<8x4xf32>
    %298 = arith.subf %291, %293 : vector<8x4xf32>
    %299 = math.exp %298 : vector<8x4xf32>
    %300 = arith.addf %295, %297 : vector<8x4xf32>
    %301 = arith.addf %300, %299 : vector<8x4xf32>
    %302 = tpu.reciprocal %301 {approx = true} : vector<8x4xf32> -> vector<8x4xf32>
    %303 = arith.mulf %295, %302 : vector<8x4xf32>
    %304 = arith.mulf %297, %302 : vector<8x4xf32>
    %305 = arith.mulf %299, %302 : vector<8x4xf32>
    %306 = tpu.concatenate %269, %270, %271, %286, %287, %288, %303, %304, %305 in 0 : vector<8x4xf32>, vector<8x4xf32>, vector<8x4xf32>, vector<8x4xf32>, vector<8x4xf32>, vector<8x4xf32>, vector<8x4xf32>, vector<8x4xf32>, vector<8x4xf32> -> vector<72x4xf32>
    %cst_109 = arith.constant dense<0.000000e+00> : vector<72x32xf32>
    %307 = tpu.matmul %306, %1, %cst_109 {dimension_numbers = #tpu.dot_dimension_numbers<[1], [0], [0], [1], [0, 0, 1, 1], [], []>} : vector<72x4xf32>, vector<4x32xf32>, vector<72x32xf32> -> vector<72x32xf32>
    %308 = tpu.concatenate %225, %225, %225 in 0 : vector<24x32xf32>, vector<24x32xf32>, vector<24x32xf32> -> vector<72x32xf32>
    %309 = arith.mulf %307, %308 : vector<72x32xf32>
    %310 = vector.extract_strided_slice %309 {offsets = [0, 0], sizes = [8, 32], strides = [1, 1]} : vector<72x32xf32> to vector<8x32xf32>
    %311 = vector.extract_strided_slice %309 {offsets = [8, 0], sizes = [8, 32], strides = [1, 1]} : vector<72x32xf32> to vector<8x32xf32>
    %312 = vector.extract_strided_slice %309 {offsets = [16, 0], sizes = [8, 32], strides = [1, 1]} : vector<72x32xf32> to vector<8x32xf32>
    %313 = arith.addf %310, %311 : vector<8x32xf32>
    %314 = arith.addf %313, %312 : vector<8x32xf32>
    %315 = vector.extract_strided_slice %309 {offsets = [24, 0], sizes = [8, 32], strides = [1, 1]} : vector<72x32xf32> to vector<8x32xf32>
    %316 = vector.extract_strided_slice %309 {offsets = [32, 0], sizes = [8, 32], strides = [1, 1]} : vector<72x32xf32> to vector<8x32xf32>
    %317 = vector.extract_strided_slice %309 {offsets = [40, 0], sizes = [8, 32], strides = [1, 1]} : vector<72x32xf32> to vector<8x32xf32>
    %318 = arith.addf %315, %316 : vector<8x32xf32>
    %319 = arith.addf %318, %317 : vector<8x32xf32>
    %320 = vector.extract_strided_slice %309 {offsets = [48, 0], sizes = [8, 32], strides = [1, 1]} : vector<72x32xf32> to vector<8x32xf32>
    %321 = vector.extract_strided_slice %309 {offsets = [56, 0], sizes = [8, 32], strides = [1, 1]} : vector<72x32xf32> to vector<8x32xf32>
    %322 = vector.extract_strided_slice %309 {offsets = [64, 0], sizes = [8, 32], strides = [1, 1]} : vector<72x32xf32> to vector<8x32xf32>
    %323 = arith.addf %320, %321 : vector<8x32xf32>
    %324 = arith.addf %323, %322 : vector<8x32xf32>
    %325 = tpu.concatenate %314, %319, %324 in 0 : vector<8x32xf32>, vector<8x32xf32>, vector<8x32xf32> -> vector<24x32xf32>
    %c1_110 = arith.constant 1 : index
    %c0_111 = arith.constant 0 : index
    %c0_112 = arith.constant 0 : index
    %326 = vector.load %arg7[%c1_110, %c0_111, %c0_112] : memref<2x32x32xf32, #tpu.memory_space<vmem>>, vector<1x32x32xf32>
    %327 = vector.shape_cast %326 : vector<1x32x32xf32> to vector<32x32xf32>
    %c1_113 = arith.constant 1 : index
    %c0_114 = arith.constant 0 : index
    %c0_115 = arith.constant 0 : index
    %328 = vector.load %arg8[%c1_113, %c0_114, %c0_115] : memref<2x1x32xf32, #tpu.memory_space<vmem>>, vector<1x1x32xf32>
    %329 = vector.shape_cast %328 : vector<1x1x32xf32> to vector<1x32xf32>
    %cst_116 = arith.constant dense<0.000000e+00> : vector<24x32xf32>
    %330 = tpu.matmul %325, %327, %cst_116 {dimension_numbers = #tpu.dot_dimension_numbers<[1], [1], [0], [0], [0, 0, 1, 0], [], []>} : vector<24x32xf32>, vector<32x32xf32>, vector<24x32xf32> -> vector<24x32xf32>
    %331 = vector.broadcast %329 : vector<1x32xf32> to vector<24x32xf32>
    %332 = arith.addf %330, %331 : vector<24x32xf32>
    %333 = arith.addf %202, %332 : vector<24x32xf32>
    %c1_117 = arith.constant 1 : index
    %c0_118 = arith.constant 0 : index
    %c0_119 = arith.constant 0 : index
    %334 = vector.load %arg9[%c1_117, %c0_118, %c0_119] : memref<2x1x32xf32, #tpu.memory_space<vmem>>, vector<1x1x32xf32>
    %335 = vector.shape_cast %334 : vector<1x1x32xf32> to vector<1x32xf32>
    %c1_120 = arith.constant 1 : index
    %c0_121 = arith.constant 0 : index
    %c0_122 = arith.constant 0 : index
    %336 = vector.load %arg10[%c1_120, %c0_121, %c0_122] : memref<2x1x32xf32, #tpu.memory_space<vmem>>, vector<1x1x32xf32>
    %337 = vector.shape_cast %336 : vector<1x1x32xf32> to vector<1x32xf32>
    %cst_123 = arith.constant dense<0.000000e+00> : vector<24xf32>
    %338 = vector.multi_reduction <add>, %333, %cst_123 [1] : vector<24x32xf32> to vector<24xf32>
    %339 = vector.shape_cast %338 : vector<24xf32> to vector<24x1xf32>
    %cst_124 = arith.constant 3.200000e+01 : f32
    %340 = vector.broadcast %cst_124 : f32 to vector<24x1xf32>
    %341 = arith.divf %339, %340 : vector<24x1xf32>
    %342 = vector.broadcast %341 : vector<24x1xf32> to vector<24x32xf32>
    %343 = arith.subf %333, %342 : vector<24x32xf32>
    %344 = arith.mulf %343, %343 : vector<24x32xf32>
    %cst_125 = arith.constant dense<0.000000e+00> : vector<24xf32>
    %345 = vector.multi_reduction <add>, %344, %cst_125 [1] : vector<24x32xf32> to vector<24xf32>
    %346 = vector.shape_cast %345 : vector<24xf32> to vector<24x1xf32>
    %cst_126 = arith.constant 3.200000e+01 : f32
    %347 = vector.broadcast %cst_126 : f32 to vector<24x1xf32>
    %348 = arith.divf %346, %347 : vector<24x1xf32>
    %cst_127 = arith.constant 9.99999974E-6 : f32
    %349 = vector.broadcast %cst_127 : f32 to vector<24x1xf32>
    %350 = arith.addf %348, %349 : vector<24x1xf32>
    %351 = math.rsqrt %350 : vector<24x1xf32>
    %352 = vector.broadcast %351 : vector<24x1xf32> to vector<24x32xf32>
    %353 = arith.mulf %343, %352 : vector<24x32xf32>
    %354 = vector.broadcast %335 : vector<1x32xf32> to vector<24x32xf32>
    %355 = arith.mulf %353, %354 : vector<24x32xf32>
    %356 = vector.broadcast %337 : vector<1x32xf32> to vector<24x32xf32>
    %357 = arith.addf %355, %356 : vector<24x32xf32>
    %c1_128 = arith.constant 1 : index
    %c0_129 = arith.constant 0 : index
    %c0_130 = arith.constant 0 : index
    %358 = vector.load %arg13[%c1_128, %c0_129, %c0_130] : memref<2x64x32xf32, #tpu.memory_space<vmem>>, vector<1x64x32xf32>
    %359 = vector.shape_cast %358 : vector<1x64x32xf32> to vector<64x32xf32>
    %c1_131 = arith.constant 1 : index
    %c0_132 = arith.constant 0 : index
    %c0_133 = arith.constant 0 : index
    %360 = vector.load %arg14[%c1_131, %c0_132, %c0_133] : memref<2x1x64xf32, #tpu.memory_space<vmem>>, vector<1x1x64xf32>
    %361 = vector.shape_cast %360 : vector<1x1x64xf32> to vector<1x64xf32>
    %cst_134 = arith.constant dense<0.000000e+00> : vector<24x64xf32>
    %362 = tpu.matmul %357, %359, %cst_134 {dimension_numbers = #tpu.dot_dimension_numbers<[1], [1], [0], [0], [0, 0, 1, 0], [], []>} : vector<24x32xf32>, vector<64x32xf32>, vector<24x64xf32> -> vector<24x64xf32>
    %363 = vector.broadcast %361 : vector<1x64xf32> to vector<24x64xf32>
    %364 = arith.addf %362, %363 : vector<24x64xf32>
    %cst_135 = arith.constant 0.000000e+00 : f32
    %365 = vector.broadcast %cst_135 : f32 to vector<24x64xf32>
    %366 = arith.maximumf %364, %365 : vector<24x64xf32>
    %c1_136 = arith.constant 1 : index
    %c0_137 = arith.constant 0 : index
    %c0_138 = arith.constant 0 : index
    %367 = vector.load %arg15[%c1_136, %c0_137, %c0_138] : memref<2x32x64xf32, #tpu.memory_space<vmem>>, vector<1x32x64xf32>
    %368 = vector.shape_cast %367 : vector<1x32x64xf32> to vector<32x64xf32>
    %c1_139 = arith.constant 1 : index
    %c0_140 = arith.constant 0 : index
    %c0_141 = arith.constant 0 : index
    %369 = vector.load %arg16[%c1_139, %c0_140, %c0_141] : memref<2x1x32xf32, #tpu.memory_space<vmem>>, vector<1x1x32xf32>
    %370 = vector.shape_cast %369 : vector<1x1x32xf32> to vector<1x32xf32>
    %cst_142 = arith.constant dense<0.000000e+00> : vector<24x32xf32>
    %371 = tpu.matmul %366, %368, %cst_142 {dimension_numbers = #tpu.dot_dimension_numbers<[1], [1], [0], [0], [0, 0, 1, 0], [], []>} : vector<24x64xf32>, vector<32x64xf32>, vector<24x32xf32> -> vector<24x32xf32>
    %372 = vector.broadcast %370 : vector<1x32xf32> to vector<24x32xf32>
    %373 = arith.addf %371, %372 : vector<24x32xf32>
    %374 = arith.addf %357, %373 : vector<24x32xf32>
    %c1_143 = arith.constant 1 : index
    %c0_144 = arith.constant 0 : index
    %c0_145 = arith.constant 0 : index
    %375 = vector.load %arg11[%c1_143, %c0_144, %c0_145] : memref<2x1x32xf32, #tpu.memory_space<vmem>>, vector<1x1x32xf32>
    %376 = vector.shape_cast %375 : vector<1x1x32xf32> to vector<1x32xf32>
    %c1_146 = arith.constant 1 : index
    %c0_147 = arith.constant 0 : index
    %c0_148 = arith.constant 0 : index
    %377 = vector.load %arg12[%c1_146, %c0_147, %c0_148] : memref<2x1x32xf32, #tpu.memory_space<vmem>>, vector<1x1x32xf32>
    %378 = vector.shape_cast %377 : vector<1x1x32xf32> to vector<1x32xf32>
    %cst_149 = arith.constant dense<0.000000e+00> : vector<24xf32>
    %379 = vector.multi_reduction <add>, %374, %cst_149 [1] : vector<24x32xf32> to vector<24xf32>
    %380 = vector.shape_cast %379 : vector<24xf32> to vector<24x1xf32>
    %cst_150 = arith.constant 3.200000e+01 : f32
    %381 = vector.broadcast %cst_150 : f32 to vector<24x1xf32>
    %382 = arith.divf %380, %381 : vector<24x1xf32>
    %383 = vector.broadcast %382 : vector<24x1xf32> to vector<24x32xf32>
    %384 = arith.subf %374, %383 : vector<24x32xf32>
    %385 = arith.mulf %384, %384 : vector<24x32xf32>
    %cst_151 = arith.constant dense<0.000000e+00> : vector<24xf32>
    %386 = vector.multi_reduction <add>, %385, %cst_151 [1] : vector<24x32xf32> to vector<24xf32>
    %387 = vector.shape_cast %386 : vector<24xf32> to vector<24x1xf32>
    %cst_152 = arith.constant 3.200000e+01 : f32
    %388 = vector.broadcast %cst_152 : f32 to vector<24x1xf32>
    %389 = arith.divf %387, %388 : vector<24x1xf32>
    %cst_153 = arith.constant 9.99999974E-6 : f32
    %390 = vector.broadcast %cst_153 : f32 to vector<24x1xf32>
    %391 = arith.addf %389, %390 : vector<24x1xf32>
    %392 = math.rsqrt %391 : vector<24x1xf32>
    %393 = vector.broadcast %392 : vector<24x1xf32> to vector<24x32xf32>
    %394 = arith.mulf %384, %393 : vector<24x32xf32>
    %395 = vector.broadcast %376 : vector<1x32xf32> to vector<24x32xf32>
    %396 = arith.mulf %394, %395 : vector<24x32xf32>
    %397 = vector.broadcast %378 : vector<1x32xf32> to vector<24x32xf32>
    %398 = arith.addf %396, %397 : vector<24x32xf32>
    %399 = vector.extract_strided_slice %398 {offsets = [0, 0], sizes = [8, 32], strides = [1, 1]} : vector<24x32xf32> to vector<8x32xf32>
    %400 = vector.extract_strided_slice %398 {offsets = [8, 0], sizes = [8, 32], strides = [1, 1]} : vector<24x32xf32> to vector<8x32xf32>
    %401 = vector.extract_strided_slice %398 {offsets = [16, 0], sizes = [8, 32], strides = [1, 1]} : vector<24x32xf32> to vector<8x32xf32>
    %402 = arith.addf %399, %400 : vector<8x32xf32>
    %403 = arith.addf %402, %401 : vector<8x32xf32>
    %cst_154 = arith.constant 0.333333343 : f32
    %404 = vector.broadcast %cst_154 : f32 to vector<8x32xf32>
    %405 = arith.mulf %403, %404 : vector<8x32xf32>
    %c0_155 = arith.constant 0 : index
    %c0_156 = arith.constant 0 : index
    %406 = vector.load %arg17[%c0_155, %c0_156] : memref<8x32xf32, #tpu.memory_space<vmem>>, vector<8x32xf32>
    tpu.vector_store %arg17[%c0_155, %c0_156], %405 {strides = array<i32>} : memref<8x32xf32, #tpu.memory_space<vmem>>, vector<8x32xf32>,
    return
  }
  func.func @transform_0(%arg0: i32) -> (i32, i32, i32) {
    %c0_i32 = arith.constant 0 : i32
    %c0_i32_0 = arith.constant 0 : i32
    %c0_i32_1 = arith.constant 0 : i32
    return %c0_i32, %arg0, %c0_i32_0 : i32, i32, i32
  }
  func.func @transform_1(%arg0: i32) -> (i32, i32, i32) {
    %c0_i32 = arith.constant 0 : i32
    %c0_i32_0 = arith.constant 0 : i32
    %c0_i32_1 = arith.constant 0 : i32
    %c0_i32_2 = arith.constant 0 : i32
    return %c0_i32, %c0_i32_0, %c0_i32_1 : i32, i32, i32
  }
  func.func @transform_2(%arg0: i32) -> (i32, i32) {
    %c0_i32 = arith.constant 0 : i32
    %c0_i32_0 = arith.constant 0 : i32
    %c0_i32_1 = arith.constant 0 : i32
    return %c0_i32, %c0_i32_0 : i32, i32
  }
  func.func @transform_3(%arg0: i32) -> (i32, i32) {
    %c0_i32 = arith.constant 0 : i32
    %c0_i32_0 = arith.constant 0 : i32
    %c0_i32_1 = arith.constant 0 : i32
    return %c0_i32, %c0_i32_0 : i32, i32
  }
  func.func @transform_4(%arg0: i32) -> (i32, i32, i32, i32) {
    %c0_i32 = arith.constant 0 : i32
    %c0_i32_0 = arith.constant 0 : i32
    %c0_i32_1 = arith.constant 0 : i32
    %c0_i32_2 = arith.constant 0 : i32
    %c0_i32_3 = arith.constant 0 : i32
    return %c0_i32, %c0_i32_0, %c0_i32_1, %c0_i32_2 : i32, i32, i32, i32
  }
  func.func @transform_5(%arg0: i32) -> (i32, i32, i32, i32) {
    %c0_i32 = arith.constant 0 : i32
    %c0_i32_0 = arith.constant 0 : i32
    %c0_i32_1 = arith.constant 0 : i32
    %c0_i32_2 = arith.constant 0 : i32
    %c0_i32_3 = arith.constant 0 : i32
    return %c0_i32, %c0_i32_0, %c0_i32_1, %c0_i32_2 : i32, i32, i32, i32
  }
  func.func @transform_6(%arg0: i32) -> (i32, i32, i32) {
    %c0_i32 = arith.constant 0 : i32
    %c0_i32_0 = arith.constant 0 : i32
    %c0_i32_1 = arith.constant 0 : i32
    %c0_i32_2 = arith.constant 0 : i32
    return %c0_i32, %c0_i32_0, %c0_i32_1 : i32, i32, i32
  }
  func.func @transform_7(%arg0: i32) -> (i32, i32, i32) {
    %c0_i32 = arith.constant 0 : i32
    %c0_i32_0 = arith.constant 0 : i32
    %c0_i32_1 = arith.constant 0 : i32
    %c0_i32_2 = arith.constant 0 : i32
    return %c0_i32, %c0_i32_0, %c0_i32_1 : i32, i32, i32
  }
  func.func @transform_8(%arg0: i32) -> (i32, i32, i32) {
    %c0_i32 = arith.constant 0 : i32
    %c0_i32_0 = arith.constant 0 : i32
    %c0_i32_1 = arith.constant 0 : i32
    %c0_i32_2 = arith.constant 0 : i32
    return %c0_i32, %c0_i32_0, %c0_i32_1 : i32, i32, i32
  }
  func.func @transform_9(%arg0: i32) -> (i32, i32, i32) {
    %c0_i32 = arith.constant 0 : i32
    %c0_i32_0 = arith.constant 0 : i32
    %c0_i32_1 = arith.constant 0 : i32
    %c0_i32_2 = arith.constant 0 : i32
    return %c0_i32, %c0_i32_0, %c0_i32_1 : i32, i32, i32
  }
  func.func @transform_10(%arg0: i32) -> (i32, i32, i32) {
    %c0_i32 = arith.constant 0 : i32
    %c0_i32_0 = arith.constant 0 : i32
    %c0_i32_1 = arith.constant 0 : i32
    %c0_i32_2 = arith.constant 0 : i32
    return %c0_i32, %c0_i32_0, %c0_i32_1 : i32, i32, i32
  }
  func.func @transform_11(%arg0: i32) -> (i32, i32, i32) {
    %c0_i32 = arith.constant 0 : i32
    %c0_i32_0 = arith.constant 0 : i32
    %c0_i32_1 = arith.constant 0 : i32
    %c0_i32_2 = arith.constant 0 : i32
    return %c0_i32, %c0_i32_0, %c0_i32_1 : i32, i32, i32
  }
  func.func @transform_12(%arg0: i32) -> (i32, i32, i32) {
    %c0_i32 = arith.constant 0 : i32
    %c0_i32_0 = arith.constant 0 : i32
    %c0_i32_1 = arith.constant 0 : i32
    %c0_i32_2 = arith.constant 0 : i32
    return %c0_i32, %c0_i32_0, %c0_i32_1 : i32, i32, i32
  }
  func.func @transform_13(%arg0: i32) -> (i32, i32, i32) {
    %c0_i32 = arith.constant 0 : i32
    %c0_i32_0 = arith.constant 0 : i32
    %c0_i32_1 = arith.constant 0 : i32
    %c0_i32_2 = arith.constant 0 : i32
    return %c0_i32, %c0_i32_0, %c0_i32_1 : i32, i32, i32
  }
  func.func @transform_14(%arg0: i32) -> (i32, i32, i32) {
    %c0_i32 = arith.constant 0 : i32
    %c0_i32_0 = arith.constant 0 : i32
    %c0_i32_1 = arith.constant 0 : i32
    %c0_i32_2 = arith.constant 0 : i32
    return %c0_i32, %c0_i32_0, %c0_i32_1 : i32, i32, i32
  }
  func.func @transform_15(%arg0: i32) -> (i32, i32, i32) {
    %c0_i32 = arith.constant 0 : i32
    %c0_i32_0 = arith.constant 0 : i32
    %c0_i32_1 = arith.constant 0 : i32
    %c0_i32_2 = arith.constant 0 : i32
    return %c0_i32, %c0_i32_0, %c0_i32_1 : i32, i32, i32
  }
  func.func @transform_16(%arg0: i32) -> (i32, i32) {
    %c0_i32 = arith.constant 0 : i32
    %c0_i32_0 = arith.constant 0 : i32
    return %arg0, %c0_i32 : i32, i32
  }
}

</mosaic_0001>

<llo_original>
// kernel: tpu_custom_call.1
$region0: #{tpu_custom_call.1}
  #allocation0 [shape = 'u32[]', space=smem, size = 0x4, offset = 0x4, fixed_abs, tag = 'smem constant byte address 0x4 - core index']
  #allocation1 [shape = 'u32[72,128]{1,0:T(1,128)}', space=vmem, size = 0x9000, scoped, tag = 'internal scratch']
  %s0 = inlined_call_operand.vmem [shape: f32[3,8,32], index: 0, kind: input, shape index: {}]
  %s1 = inlined_call_operand.vmem [shape: f32[3,1,32], index: 1, kind: input, shape index: {}]
  %s2 = inlined_call_operand.vmem [shape: f32[32,4], index: 2, kind: input, shape index: {}]
  %s3 = inlined_call_operand.vmem [shape: f32[4,32], index: 3, kind: input, shape index: {}]
  %s4 = inlined_call_operand.vmem [shape: f32[2,3,32,32], index: 4, kind: input, shape index: {}]
  %s5 = inlined_call_operand.vmem [shape: f32[2,3,1,32], index: 5, kind: input, shape index: {}]
  %s6 = inlined_call_operand.hbm [shape: f32[2,32,32], index: 6, kind: input, shape index: {}]
  %s7 = inlined_call_operand.vmem [shape: f32[2,1,32], index: 7, kind: input, shape index: {}]
  %s8 = inlined_call_operand.vmem [shape: f32[2,1,32], index: 8, kind: input, shape index: {}]
  %s9 = inlined_call_operand.vmem [shape: f32[2,1,32], index: 9, kind: input, shape index: {}]
  %s10 = inlined_call_operand.hbm [shape: f32[2,1,32], index: 10, kind: input, shape index: {}]
  %s11 = inlined_call_operand.hbm [shape: f32[2,1,32], index: 11, kind: input, shape index: {}]
  %s12 = inlined_call_operand.vmem [shape: f32[2,64,32], index: 12, kind: input, shape index: {}]
  %s13 = inlined_call_operand.vmem [shape: f32[2,1,64], index: 13, kind: input, shape index: {}]
  %s14 = inlined_call_operand.hbm [shape: f32[2,32,64], index: 14, kind: input, shape index: {}]
  %s15 = inlined_call_operand.vmem [shape: f32[2,1,32], index: 15, kind: input, shape index: {}]
  %s16 = inlined_call_operand.hbm [shape: f32[8,32], index: 16, kind: output, shape index: {}]
  %s17 = sld [smem:[#allocation0]]
  $region90: #{tpu_custom_call.1} parent=0
    _
  %s19 = ssub.s32 1, %s17
  %s20 = scalar_select 0, %s19, %s17
  $region1: #{tpu_custom_call.1} parent=0
    #allocation2 [shape = 'u8[32768]{0}', space=vmem, size = 0x8000, scoped, tag = 'input window, operand 6, single buffered']
    #allocation3 [shape = 's32[1]{0}', space=sflag, size = 0x4, scoped, tag = 'scoped memory for tpu_custom_call.1']
    #allocation4 [shape = 's32[1]{0}', space=sflag, size = 0x4, scoped, tag = 'scoped memory for tpu_custom_call.1']
    #allocation5 [shape = 'u8[1024]{0}', space=vmem, size = 0x400, scoped, tag = 'input window, operand 10, single buffered']
    #allocation6 [shape = 's32[1]{0}', space=sflag, size = 0x4, scoped, tag = 'scoped memory for tpu_custom_call.1']
    #allocation7 [shape = 'u8[1024]{0}', space=vmem, size = 0x400, scoped, tag = 'input window, operand 11, single buffered']
    #allocation8 [shape = 'u8[32768]{0}', space=vmem, size = 0x8000, scoped, tag = 'input window, operand 14, single buffered']
    #allocation9 [shape = 's32[1]{0}', space=sflag, size = 0x4, scoped, tag = 'scoped memory for tpu_custom_call.1']
    #allocation10 [shape = 'u8[4096]{0}', space=vmem, size = 0x1000, scoped, tag = 'output window, operand 0, single buffered']
    %21 = vsyncpa [#allocation3], 0
    %22 = vsyncpa [#allocation6], 0
    %23 = vsyncpa [#allocation9], 0
    %24 = vsyncpa [#allocation4], 0
    // Predicated region
    $region2: #{tpu_custom_call.1} parent=1 // pred_check
      _
    $region3: #{tpu_custom_call.1} parent=1 // pred_check_branch
      %26 = sbr.rel (0) target = $region5
    $region4: #{tpu_custom_call.1} parent=1 // pred_region
      _
    $region5: #{tpu_custom_call.1} parent=1 // pred_fallthru
      _
    // Predicated region
    $region6: #{tpu_custom_call.1} parent=1 // pred_check
      _
    $region7: #{tpu_custom_call.1} parent=1 // pred_check_branch
      %28 = sbr.rel (0) target = $region9
    $region8: #{tpu_custom_call.1} parent=1 // pred_region
      _
    $region9: #{tpu_custom_call.1} parent=1 // pred_fallthru
      _
    // Predicated region
    $region10: #{tpu_custom_call.1} parent=1 // pred_check
      _
    $region11: #{tpu_custom_call.1} parent=1 // pred_check_branch
      %30 = sbr.rel (0) target = $region13
    $region12: #{tpu_custom_call.1} parent=1 // pred_region
      _
    $region13: #{tpu_custom_call.1} parent=1 // pred_fallthru
      _
    // Predicated region
    $region14: #{tpu_custom_call.1} parent=1 // pred_check
      _
    $region15: #{tpu_custom_call.1} parent=1 // pred_check_branch
      %32 = sbr.rel (0) target = $region17
    $region16: #{tpu_custom_call.1} parent=1 // pred_region
      _
    $region17: #{tpu_custom_call.1} parent=1 // pred_fallthru
      _
    // Predicated region
    $region18: #{tpu_custom_call.1} parent=1 // pred_check
      _
    $region19: #{tpu_custom_call.1} parent=1 // pred_check_branch
      %34 = sbr.rel (0) target = $region21
    $region20: #{tpu_custom_call.1} parent=1 // pred_region
      _
    $region21: #{tpu_custom_call.1} parent=1 // pred_fallthru
      _
    // Predicated region
    $region22: #{tpu_custom_call.1} parent=1 // pred_check
      _
    $region23: #{tpu_custom_call.1} parent=1 // pred_check_branch
      %36 = sbr.rel (0) target = $region25
    $region24: #{tpu_custom_call.1} parent=1 // pred_region
      _
    $region25: #{tpu_custom_call.1} parent=1 // pred_fallthru
      _
    // Predicated region
    $region26: #{tpu_custom_call.1} parent=1 // pred_check
      _
    $region27: #{tpu_custom_call.1} parent=1 // pred_check_branch
      %38 = sbr.rel (0) target = $region29
    $region28: #{tpu_custom_call.1} parent=1 // pred_region
      %40 = vsyncadd [#allocation3], 0
      %s41 = sshll.u32 %s6, 4
      %s42 = int_to_ptr.hbm [resolvable:$true] %s41
      %s43 = sshll.u32 [#allocation2], 4
      %s44 = int_to_ptr.vmem [resolvable:$true] %s43
      %49 = dma.hbm_to_vmem [thread:$0]  %s42, 1024, %s44, [#allocation3], 128, 128, 8
    $region29: #{tpu_custom_call.1} parent=1 // pred_fallthru
      _
    // Predicated region
    $region30: #{tpu_custom_call.1} parent=1 // pred_check
      _
    $region31: #{tpu_custom_call.1} parent=1 // pred_check_branch
      %51 = sbr.rel (0) target = $region33
    $region32: #{tpu_custom_call.1} parent=1 // pred_region
      _
    $region33: #{tpu_custom_call.1} parent=1 // pred_fallthru
      _
    // Predicated region
    $region34: #{tpu_custom_call.1} parent=1 // pred_check
      _
    $region35: #{tpu_custom_call.1} parent=1 // pred_check_branch
      %53 = sbr.rel (0) target = $region37
    $region36: #{tpu_custom_call.1} parent=1 // pred_region
      _
    $region37: #{tpu_custom_call.1} parent=1 // pred_fallthru
      _
    // Predicated region
    $region38: #{tpu_custom_call.1} parent=1 // pred_check
      _
    $region39: #{tpu_custom_call.1} parent=1 // pred_check_branch
      %55 = sbr.rel (0) target = $region41
    $region40: #{tpu_custom_call.1} parent=1 // pred_region
      _
    $region41: #{tpu_custom_call.1} parent=1 // pred_fallthru
      _
    // Predicated region
    $region42: #{tpu_custom_call.1} parent=1 // pred_check
      _
    $region43: #{tpu_custom_call.1} parent=1 // pred_check_branch
      %57 = sbr.rel (0) target = $region45
    $region44: #{tpu_custom_call.1} parent=1 // pred_region
      %59 = vsyncadd [#allocation6], 0
      %s60 = sshll.u32 %s10, 4
      %s61 = int_to_ptr.hbm [resolvable:$true] %s60
      %s62 = sshll.u32 [#allocation5], 4
      %s63 = int_to_ptr.vmem [resolvable:$true] %s62
      %68 = dma.hbm_to_vmem [thread:$0]  %s61, 32, %s63, [#allocation6], 16, 16, 1
    $region45: #{tpu_custom_call.1} parent=1 // pred_fallthru
      _
    // Predicated region
    $region46: #{tpu_custom_call.1} parent=1 // pred_check
      _
    $region47: #{tpu_custom_call.1} parent=1 // pred_check_branch
      %70 = sbr.rel (0) target = $region49
    $region48: #{tpu_custom_call.1} parent=1 // pred_region
      %72 = vsyncadd [#allocation6], 0
      %s73 = sshll.u32 %s11, 4
      %s74 = int_to_ptr.hbm [resolvable:$true] %s73
      %s75 = sshll.u32 [#allocation7], 4
      %s76 = int_to_ptr.vmem [resolvable:$true] %s75
      %81 = dma.hbm_to_vmem [thread:$0]  %s74, 32, %s76, [#allocation6], 16, 16, 1
    $region49: #{tpu_custom_call.1} parent=1 // pred_fallthru
      _
    // Predicated region
    $region50: #{tpu_custom_call.1} parent=1 // pred_check
      _
    $region51: #{tpu_custom_call.1} parent=1 // pred_check_branch
      %83 = sbr.rel (0) target = $region53
    $region52: #{tpu_custom_call.1} parent=1 // pred_region
      _
    $region53: #{tpu_custom_call.1} parent=1 // pred_fallthru
      _
    // Predicated region
    $region54: #{tpu_custom_call.1} parent=1 // pred_check
      _
    $region55: #{tpu_custom_call.1} parent=1 // pred_check_branch
      %85 = sbr.rel (0) target = $region57
    $region56: #{tpu_custom_call.1} parent=1 // pred_region
      _
    $region57: #{tpu_custom_call.1} parent=1 // pred_fallthru
      _
    // Predicated region
    $region58: #{tpu_custom_call.1} parent=1 // pred_check
      _
    $region59: #{tpu_custom_call.1} parent=1 // pred_check_branch
      %87 = sbr.rel (0) target = $region61
    $region60: #{tpu_custom_call.1} parent=1 // pred_region
      %89 = vsyncadd [#allocation9], 0
      %s90 = sshll.u32 %s14, 4
      %s91 = int_to_ptr.hbm [resolvable:$true] %s90
      %s92 = sshll.u32 [#allocation8], 4
      %s93 = int_to_ptr.vmem [resolvable:$true] %s92
      %98 = dma.hbm_to_vmem [thread:$0]  %s91, 1024, %s93, [#allocation9], 128, 128, 8
    $region61: #{tpu_custom_call.1} parent=1 // pred_fallthru
      _
    // Predicated region
    $region62: #{tpu_custom_call.1} parent=1 // pred_check
      _
    $region63: #{tpu_custom_call.1} parent=1 // pred_check_branch
      %100 = sbr.rel (0) target = $region65
    $region64: #{tpu_custom_call.1} parent=1 // pred_region
      _
    $region65: #{tpu_custom_call.1} parent=1 // pred_fallthru
      _
    // Predicated region
    $region66: #{tpu_custom_call.1} parent=1 // pred_check
      _
    $region67: #{tpu_custom_call.1} parent=1 // pred_check_branch
      %102 = sbr.rel (0) target = $region69
    $region68: #{tpu_custom_call.1} parent=1 // pred_region
      %104 = dma.done [#allocation3], 1024
    $region69: #{tpu_custom_call.1} parent=1 // pred_fallthru
      _
    // Predicated region
    $region70: #{tpu_custom_call.1} parent=1 // pred_check
      _
    $region71: #{tpu_custom_call.1} parent=1 // pred_check_branch
      %106 = sbr.rel (0) target = $region73
    $region72: #{tpu_custom_call.1} parent=1 // pred_region
      %108 = dma.done [#allocation6], 32
    $region73: #{tpu_custom_call.1} parent=1 // pred_fallthru
      _
    // Predicated region
    $region74: #{tpu_custom_call.1} parent=1 // pred_check
      _
    $region75: #{tpu_custom_call.1} parent=1 // pred_check_branch
      %110 = sbr.rel (0) target = $region77
    $region76: #{tpu_custom_call.1} parent=1 // pred_region
      %112 = dma.done [#allocation6], 32
    $region77: #{tpu_custom_call.1} parent=1 // pred_fallthru
      _
    // Predicated region
    $region78: #{tpu_custom_call.1} parent=1 // pred_check
      _
    $region79: #{tpu_custom_call.1} parent=1 // pred_check_branch
      %114 = sbr.rel (0) target = $region81
    $region80: #{tpu_custom_call.1} parent=1 // pred_region
      %116 = dma.done [#allocation9], 1024
    $region81: #{tpu_custom_call.1} parent=1 // pred_fallthru
      _
    %v117 = vld [vmem:[%s2] sm:$0xff]
    %v118 = vld [vmem:[%s2 + $0x8] sm:$0xff]
    %v119 = vld [vmem:[%s2 + $0x10] sm:$0xff]
    %v120 = vld [vmem:[%s2 + $0x18] sm:$0xff]
    %v121 = vld [vmem:[%s3] sm:$0xf]
    %v122 = vld [vmem:[%s0] sm:$0xff]
    %v123 = vld [vmem:[%s0 + $0x8] sm:$0xff]
    %v124 = vld [vmem:[%s0 + $0x10] sm:$0xff]
    %v125 = vld [vmem:[%s1] sm:$0x1]
    %v126 = vld [vmem:[%s1 + $0x1] sm:$0x1]
    %v127 = vld [vmem:[%s1 + $0x2] sm:$0x1]
    %v131 = vperm.slane %v125, 0
    %v132 = vperm.slane %v126, 0
    %v133 = vperm.slane %v127, 0
    %v137 = vadd.f32 %v122, %v131
    %v138 = vadd.f32 %v123, %v132
    %v139 = vadd.f32 %v124, %v133
    %v140 = vld [vmem:[%s4] sm:$0xff]
    %v141 = vld [vmem:[%s4 + $0x8] sm:$0xff]
    %v142 = vld [vmem:[%s4 + $0x10] sm:$0xff]
    %v143 = vld [vmem:[%s4 + $0x18] sm:$0xff]
    %v144 = vld [vmem:[%s5] sm:$0x1]
    %v146 = vperm.slane %v144, 0
    %vm148 = vcmask 261120
    %v150 = vsel %vm148, %v137, 0
    %v153 = vsel %vm148, %v138, 0
    %v156 = vsel %vm148, %v139, 0
    %v159 = vsel %vm148, %v140, 0
    %v162 = vsel %vm148, %v141, 0
    %v165 = vsel %vm148, %v142, 0
    %v168 = vsel %vm148, %v143, 0
    %170 = vmatpush.xpose.msra.mxu0 0.0
    %171 = vmatpush.xpose.msra.mxu0 0.0
    %172 = vmatpush.xpose.msra.mxu0 0.0
    %173 = vmatpush.xpose.msra.mxu0 0.0
    %174 = vmatpush.xpose.msra.mxu0 0.0
    %175 = vmatpush.xpose.msra.mxu0 0.0
    %176 = vmatpush.xpose.msra.mxu0 0.0
    %177 = vmatpush.xpose.msra.mxu0 0.0
    %178 = vmatpush.xpose.msra.mxu0 0.0
    %179 = vmatpush.xpose.msra.mxu0 0.0
    %180 = vmatpush.xpose.msra.mxu0 0.0
    %181 = vmatpush.xpose.msra.mxu0 0.0
    %182 = vmatpush.xpose.msra.mxu0 %v168
    %183 = vmatpush.xpose.msra.mxu0 %v165
    %184 = vmatpush.xpose.msra.mxu0 %v162
    %185 = vmatpush.xpose.msra.mxu0 %v159
    %186 = vmatmul.f32.gmra.mxu0 %v150
    %v187 = vpop.f32.mrf.mxu0
    %v188 = vadd.f32 %v146, %v187
    %189 = vmatmul.f32.gmra.mxu0 %v153
    %v190 = vpop.f32.mrf.mxu0
    %v191 = vadd.f32 %v146, %v190
    %192 = vmatmul.f32.gmra.mxu0 %v156
    %v193 = vpop.f32.mrf.mxu0
    %v194 = vadd.f32 %v146, %v193
    %195 = vdwg.mxu0
    %v196 = vmul.f32 %v188, 0.35355338
    %v197 = vmul.f32 %v191, 0.35355338
    %v198 = vmul.f32 %v194, 0.35355338
    %s199 = scalar_lea.vmem %s4, 32
    %v200 = vld [vmem:[%s199] sm:$0xff]
    %v201 = vld [vmem:[%s199 + $0x8] sm:$0xff]
    %v202 = vld [vmem:[%s199 + $0x10] sm:$0xff]
    %v203 = vld [vmem:[%s199 + $0x18] sm:$0xff]
    %s204 = scalar_lea.vmem %s5, 1
    %v205 = vld [vmem:[%s204] sm:$0x1]
    %v207 = vperm.slane %v205, 0
    %v210 = vsel %vm148, %v200, 0
    %v213 = vsel %vm148, %v201, 0
    %v216 = vsel %vm148, %v202, 0
    %v219 = vsel %vm148, %v203, 0
    %221 = vmatpush.xpose.msra.mxu0 0.0
    %222 = vmatpush.xpose.msra.mxu0 0.0
    %223 = vmatpush.xpose.msra.mxu0 0.0
    %224 = vmatpush.xpose.msra.mxu0 0.0
    %225 = vmatpush.xpose.msra.mxu0 0.0
    %226 = vmatpush.xpose.msra.mxu0 0.0
    %227 = vmatpush.xpose.msra.mxu0 0.0
    %228 = vmatpush.xpose.msra.mxu0 0.0
    %229 = vmatpush.xpose.msra.mxu0 0.0
    %230 = vmatpush.xpose.msra.mxu0 0.0
    %231 = vmatpush.xpose.msra.mxu0 0.0
    %232 = vmatpush.xpose.msra.mxu0 0.0
    %233 = vmatpush.xpose.msra.mxu0 %v219
    %234 = vmatpush.xpose.msra.mxu0 %v216
    %235 = vmatpush.xpose.msra.mxu0 %v213
    %236 = vmatpush.xpose.msra.mxu0 %v210
    %237 = vmatmul.f32.gmra.mxu0 %v150
    %v238 = vpop.f32.mrf.mxu0
    %v239 = vadd.f32 %v207, %v238
    %240 = vmatmul.f32.gmra.mxu0 %v153
    %v241 = vpop.f32.mrf.mxu0
    %v242 = vadd.f32 %v207, %v241
    %243 = vmatmul.f32.gmra.mxu0 %v156
    %v244 = vpop.f32.mrf.mxu0
    %v245 = vadd.f32 %v207, %v244
    %246 = vdwg.mxu0
    %s247 = scalar_lea.vmem %s4, 64
    %v248 = vld [vmem:[%s247] sm:$0xff]
    %v249 = vld [vmem:[%s247 + $0x8] sm:$0xff]
    %v250 = vld [vmem:[%s247 + $0x10] sm:$0xff]
    %v251 = vld [vmem:[%s247 + $0x18] sm:$0xff]
    %s252 = scalar_lea.vmem %s5, 2
    %v253 = vld [vmem:[%s252] sm:$0x1]
    %v255 = vperm.slane %v253, 0
    %v258 = vsel %vm148, %v248, 0
    %v261 = vsel %vm148, %v249, 0
    %v264 = vsel %vm148, %v250, 0
    %v267 = vsel %vm148, %v251, 0
    %269 = vmatpush.xpose.msra.mxu0 0.0
    %270 = vmatpush.xpose.msra.mxu0 0.0
    %271 = vmatpush.xpose.msra.mxu0 0.0
    %272 = vmatpush.xpose.msra.mxu0 0.0
    %273 = vmatpush.xpose.msra.mxu0 0.0
    %274 = vmatpush.xpose.msra.mxu0 0.0
    %275 = vmatpush.xpose.msra.mxu0 0.0
    %276 = vmatpush.xpose.msra.mxu0 0.0
    %277 = vmatpush.xpose.msra.mxu0 0.0
    %278 = vmatpush.xpose.msra.mxu0 0.0
    %279 = vmatpush.xpose.msra.mxu0 0.0
    %280 = vmatpush.xpose.msra.mxu0 0.0
    %281 = vmatpush.xpose.msra.mxu0 %v267
    %282 = vmatpush.xpose.msra.mxu0 %v264
    %283 = vmatpush.xpose.msra.mxu0 %v261
    %284 = vmatpush.xpose.msra.mxu0 %v258
    %285 = vmatmul.f32.gmra.mxu0 %v150
    %v286 = vpop.f32.mrf.mxu0
    %v287 = vadd.f32 %v255, %v286
    %288 = vmatmul.f32.gmra.mxu0 %v153
    %v289 = vpop.f32.mrf.mxu0
    %v290 = vadd.f32 %v255, %v289
    %291 = vmatmul.f32.gmra.mxu0 %v156
    %v292 = vpop.f32.mrf.mxu0
    %v293 = vadd.f32 %v255, %v292
    %294 = vdwg.mxu0
    %v295 = vmul.f32 %v196, %v239
    %v296 = vmul.f32 %v196, %v242
    %v297 = vmul.f32 %v196, %v245
    %v298 = vmul.f32 %v197, %v239
    %v299 = vmul.f32 %v197, %v242
    %v300 = vmul.f32 %v197, %v245
    %v301 = vmul.f32 %v198, %v239
    %v302 = vmul.f32 %v198, %v242
    %v303 = vmul.f32 %v198, %v245
    %v305 = vsel %vm148, %v295, 0
    %v308 = vsel %vm148, %v296, 0
    %v311 = vsel %vm148, %v297, 0
    %v314 = vsel %vm148, %v298, 0
    %v317 = vsel %vm148, %v299, 0
    %v320 = vsel %vm148, %v300, 0
    %v323 = vsel %vm148, %v301, 0
    %v326 = vsel %vm148, %v302, 0
    %v329 = vsel %vm148, %v303, 0
    %331 = vmatpush.msra.mxu0 0.0
    %332 = vmatpush.msra.mxu0 0.0
    %333 = vmatpush.msra.mxu0 0.0
    %334 = vmatpush.msra.mxu0 0.0
    %335 = vmatpush.msra.mxu0 0.0
    %336 = vmatpush.msra.mxu0 0.0
    %337 = vmatpush.msra.mxu0 0.0
    %338 = vmatpush.msra.mxu0 0.0
    %339 = vmatpush.msra.mxu0 0.0
    %340 = vmatpush.msra.mxu0 0.0
    %341 = vmatpush.msra.mxu0 0.0
    %342 = vmatpush.msra.mxu0 0.0
    %343 = vmatpush.msra.mxu0 %v120
    %344 = vmatpush.msra.mxu0 %v119
    %345 = vmatpush.msra.mxu0 %v118
    %346 = vmatpush.msra.mxu0 %v117
    %347 = vmatmul.f32.gmra.mxu0 %v305
    %v348 = vpop.f32.mrf.mxu0
    %v349 = vadd.f32 0.0, %v348
    %350 = vmatmul.f32.gmra.mxu0 %v308
    %v351 = vpop.f32.mrf.mxu0
    %v352 = vadd.f32 0.0, %v351
    %353 = vmatmul.f32.gmra.mxu0 %v311
    %v354 = vpop.f32.mrf.mxu0
    %v355 = vadd.f32 0.0, %v354
    %356 = vmatmul.f32.gmra.mxu0 %v314
    %v357 = vpop.f32.mrf.mxu0
    %v358 = vadd.f32 0.0, %v357
    %359 = vmatmul.f32.gmra.mxu0 %v317
    %v360 = vpop.f32.mrf.mxu0
    %v361 = vadd.f32 0.0, %v360
    %362 = vmatmul.f32.gmra.mxu0 %v320
    %v363 = vpop.f32.mrf.mxu0
    %v364 = vadd.f32 0.0, %v363
    %365 = vmatmul.f32.gmra.mxu0 %v323
    %v366 = vpop.f32.mrf.mxu0
    %v367 = vadd.f32 0.0, %v366
    %368 = vmatmul.f32.gmra.mxu0 %v326
    %v369 = vpop.f32.mrf.mxu0
    %v370 = vadd.f32 0.0, %v369
    %371 = vmatmul.f32.gmra.mxu0 %v329
    %v372 = vpop.f32.mrf.mxu0
    %v373 = vadd.f32 0.0, %v372
    %374 = vdwg.mxu0
    %v375 = vmax.f32 %v349, %v352
    %v376 = vmax.f32 %v375, %v355
    %v377 = vsub.f32 %v349, %v376
    %v378 = vmul.f32 %v377, 1.442695
    %v379 = vpow.pop %v378
    %v380 = vsub.f32 %v352, %v376
    %v381 = vmul.f32 %v380, 1.442695
    %v382 = vpow.pop %v381
    %v383 = vsub.f32 %v355, %v376
    %v384 = vmul.f32 %v383, 1.442695
    %v385 = vpow.pop %v384
    %v386 = vadd.f32 %v379, %v382
    %v387 = vadd.f32 %v386, %v385
    %v388 = vrcp.pop %v387
    %v389 = vmul.f32 %v379, %v388
    %v390 = vmul.f32 %v382, %v388
    %v391 = vmul.f32 %v385, %v388
    %v392 = vmax.f32 %v358, %v361
    %v393 = vmax.f32 %v392, %v364
    %v394 = vsub.f32 %v358, %v393
    %v395 = vmul.f32 %v394, 1.442695
    %v396 = vpow.pop %v395
    %v397 = vsub.f32 %v361, %v393
    %v398 = vmul.f32 %v397, 1.442695
    %v399 = vpow.pop %v398
    %v400 = vsub.f32 %v364, %v393
    %v401 = vmul.f32 %v400, 1.442695
    %v402 = vpow.pop %v401
    %v403 = vadd.f32 %v396, %v399
    %v404 = vadd.f32 %v403, %v402
    %v405 = vrcp.pop %v404
    %v406 = vmul.f32 %v396, %v405
    %v407 = vmul.f32 %v399, %v405
    %v408 = vmul.f32 %v402, %v405
    %v409 = vmax.f32 %v367, %v370
    %v410 = vmax.f32 %v409, %v373
    %v411 = vsub.f32 %v367, %v410
    %v412 = vmul.f32 %v411, 1.442695
    %v413 = vpow.pop %v412
    %v414 = vsub.f32 %v370, %v410
    %v415 = vmul.f32 %v414, 1.442695
    %v416 = vpow.pop %v415
    %v417 = vsub.f32 %v373, %v410
    %v418 = vmul.f32 %v417, 1.442695
    %v419 = vpow.pop %v418
    %v420 = vadd.f32 %v413, %v416
    %v421 = vadd.f32 %v420, %v419
    %v422 = vrcp.pop %v421
    %v423 = vmul.f32 %v413, %v422
    %v424 = vmul.f32 %v416, %v422
    %v425 = vmul.f32 %v419, %v422
    %vm426 = vcmask 31744
    %v428 = vsel %vm426, %v389, 0
    %v431 = vsel %vm426, %v390, 0
    %v434 = vsel %vm426, %v391, 0
    %v437 = vsel %vm426, %v406, 0
    %v440 = vsel %vm426, %v407, 0
    %v443 = vsel %vm426, %v408, 0
    %v446 = vsel %vm426, %v423, 0
    %v449 = vsel %vm426, %v424, 0
    %v452 = vsel %vm426, %v425, 0
    %vm454 = vcmask 1043456
    %v456 = vsel %vm454, %v121, 0
    %458 = vmatpush.msra.mxu0 0.0
    %459 = vmatpush.msra.mxu0 0.0
    %460 = vmatpush.msra.mxu0 0.0
    %461 = vmatpush.msra.mxu0 0.0
    %462 = vmatpush.msra.mxu0 0.0
    %463 = vmatpush.msra.mxu0 0.0
    %464 = vmatpush.msra.mxu0 0.0
    %465 = vmatpush.msra.mxu0 0.0
    %466 = vmatpush.msra.mxu0 0.0
    %467 = vmatpush.msra.mxu0 0.0
    %468 = vmatpush.msra.mxu0 0.0
    %469 = vmatpush.msra.mxu0 0.0
    %470 = vmatpush.msra.mxu0 0.0
    %471 = vmatpush.msra.mxu0 0.0
    %472 = vmatpush.msra.mxu0 0.0
    %473 = vmatpush.msra.mxu0 %v456
    %474 = vmatmul.f32.gmra.mxu0 %v428
    %v475 = vpop.f32.mrf.mxu0
    %v476 = vadd.f32 0.0, %v475
    %477 = vmatmul.f32.gmra.mxu0 %v431
    %v478 = vpop.f32.mrf.mxu0
    %v479 = vadd.f32 0.0, %v478
    %480 = vmatmul.f32.gmra.mxu0 %v434
    %v481 = vpop.f32.mrf.mxu0
    %v482 = vadd.f32 0.0, %v481
    %483 = vmatmul.f32.gmra.mxu0 %v437
    %v484 = vpop.f32.mrf.mxu0
    %v485 = vadd.f32 0.0, %v484
    %486 = vmatmul.f32.gmra.mxu0 %v440
    %v487 = vpop.f32.mrf.mxu0
    %v488 = vadd.f32 0.0, %v487
    %489 = vmatmul.f32.gmra.mxu0 %v443
    %v490 = vpop.f32.mrf.mxu0
    %v491 = vadd.f32 0.0, %v490
    %492 = vmatmul.f32.gmra.mxu0 %v446
    %v493 = vpop.f32.mrf.mxu0
    %v494 = vadd.f32 0.0, %v493
    %495 = vmatmul.f32.gmra.mxu0 %v449
    %v496 = vpop.f32.mrf.mxu0
    %v497 = vadd.f32 0.0, %v496
    %498 = vmatmul.f32.gmra.mxu0 %v452
    %v499 = vpop.f32.mrf.mxu0
    %v500 = vadd.f32 0.0, %v499
    %501 = vdwg.mxu0
    %v502 = vmul.f32 %v476, %v287
    %v503 = vmul.f32 %v479, %v290
    %v504 = vmul.f32 %v482, %v293
    %v505 = vmul.f32 %v485, %v287
    %v506 = vmul.f32 %v488, %v290
    %v507 = vmul.f32 %v491, %v293
    %v508 = vmul.f32 %v494, %v287
    %v509 = vmul.f32 %v497, %v290
    %v510 = vmul.f32 %v500, %v293
    %v511 = vadd.f32 %v502, %v503
    %v512 = vadd.f32 %v511, %v504
    %v513 = vadd.f32 %v505, %v506
    %v514 = vadd.f32 %v513, %v507
    %v515 = vadd.f32 %v508, %v509
    %v516 = vadd.f32 %v515, %v510
    %v517 = vld [vmem:[#allocation2] sm:$0xff]
    %v518 = vld [vmem:[#allocation2 + $0x8] sm:$0xff]
    %v519 = vld [vmem:[#allocation2 + $0x10] sm:$0xff]
    %v520 = vld [vmem:[#allocation2 + $0x18] sm:$0xff]
    %v521 = vld [vmem:[%s7] sm:$0x1]
    %v523 = vperm.slane %v521, 0
    %v526 = vsel %vm148, %v512, 0
    %v529 = vsel %vm148, %v514, 0
    %v532 = vsel %vm148, %v516, 0
    %v535 = vsel %vm148, %v517, 0
    %v538 = vsel %vm148, %v518, 0
    %v541 = vsel %vm148, %v519, 0
    %v544 = vsel %vm148, %v520, 0
    %546 = vmatpush.xpose.msra.mxu0 0.0
    %547 = vmatpush.xpose.msra.mxu0 0.0
    %548 = vmatpush.xpose.msra.mxu0 0.0
    %549 = vmatpush.xpose.msra.mxu0 0.0
    %550 = vmatpush.xpose.msra.mxu0 0.0
    %551 = vmatpush.xpose.msra.mxu0 0.0
    %552 = vmatpush.xpose.msra.mxu0 0.0
    %553 = vmatpush.xpose.msra.mxu0 0.0
    %554 = vmatpush.xpose.msra.mxu0 0.0
    %555 = vmatpush.xpose.msra.mxu0 0.0
    %556 = vmatpush.xpose.msra.mxu0 0.0
    %557 = vmatpush.xpose.msra.mxu0 0.0
    %558 = vmatpush.xpose.msra.mxu0 %v544
    %559 = vmatpush.xpose.msra.mxu0 %v541
    %560 = vmatpush.xpose.msra.mxu0 %v538
    %561 = vmatpush.xpose.msra.mxu0 %v535
    %562 = vmatmul.f32.gmra.mxu0 %v526
    %v563 = vpop.f32.mrf.mxu0
    %v564 = vadd.f32 %v523, %v563
    %565 = vmatmul.f32.gmra.mxu0 %v529
    %v566 = vpop.f32.mrf.mxu0
    %v567 = vadd.f32 %v523, %v566
    %568 = vmatmul.f32.gmra.mxu0 %v532
    %v569 = vpop.f32.mrf.mxu0
    %v570 = vadd.f32 %v523, %v569
    %571 = vdwg.mxu0
    %v572 = vadd.f32 %v137, %v564
    %v573 = vadd.f32 %v138, %v567
    %v574 = vadd.f32 %v139, %v570
    %v575 = vld [vmem:[%s8] sm:$0x1]
    %v576 = vld [vmem:[%s9] sm:$0x1]
    %v577 = vsel %vm148, %v572, 0.0
    %578 = vadd.xlane.f32.xlu0 %v577
    %v579 = vpop.xlane.xlu0 %578
    %v580 = vsel %vm148, %v573, 0.0
    %581 = vadd.xlane.f32.xlu0 %v580
    %v582 = vpop.xlane.xlu0 %581
    %v583 = vsel %vm148, %v574, 0.0
    %584 = vadd.xlane.f32.xlu0 %v583
    %v585 = vpop.xlane.xlu0 %584
    %v586 = vrcp.pop 32.0
    %v587 = vmul.f32 32.0, %v586
    %v588 = vsub.f32 1.0, %v587
    %v589 = vmul.f32 %v586, %v588
    %v590 = vadd.f32 %v586, %v589
    %vm591 = vweird.f32 %v586
    %v592 = vsel %vm591, %v586, %v590
    %v593 = vmul.f32 %v579, %v592
    %v594 = vmul.f32 %v582, %v592
    %v595 = vmul.f32 %v585, %v592
    %v596 = vsub.f32 %v572, %v593
    %v597 = vsub.f32 %v573, %v594
    %v598 = vsub.f32 %v574, %v595
    %v599 = vmul.f32 %v596, %v596
    %v600 = vmul.f32 %v597, %v597
    %v601 = vmul.f32 %v598, %v598
    %v602 = vsel %vm148, %v599, 0.0
    %603 = vadd.xlane.f32.xlu0 %v602
    %v604 = vpop.xlane.xlu0 %603
    %v605 = vsel %vm148, %v600, 0.0
    %606 = vadd.xlane.f32.xlu0 %v605
    %v607 = vpop.xlane.xlu0 %606
    %v608 = vsel %vm148, %v601, 0.0
    %609 = vadd.xlane.f32.xlu0 %v608
    %v610 = vpop.xlane.xlu0 %609
    %v611 = vmul.f32 %v604, %v592
    %v612 = vmul.f32 %v607, %v592
    %v613 = vmul.f32 %v610, %v592
    %v614 = vadd.f32 %v611, 1e-05
    %v615 = vadd.f32 %v612, 1e-05
    %v616 = vadd.f32 %v613, 1e-05
    %v617 = vrsqrt.pop %v614
    %v618 = vmul.f32 %v617, %v614
    %v619 = vmul.f32 %v618, %v617
    %v620 = vmul.f32 0.5, %v619
    %v621 = vsub.f32 1.5, %v620
    %v622 = vmul.f32 %v617, %v621
    %vm623 = vweird.f32 %v614
    %vm624 = vweird.f32 %v617
    %vm625 = vmor %vm623, %vm624
    %v626 = vsel %vm625, %v617, %v622
    %v627 = vrsqrt.pop %v615
    %v628 = vmul.f32 %v627, %v615
    %v629 = vmul.f32 %v628, %v627
    %v630 = vmul.f32 0.5, %v629
    %v631 = vsub.f32 1.5, %v630
    %v632 = vmul.f32 %v627, %v631
    %vm633 = vweird.f32 %v615
    %vm634 = vweird.f32 %v627
    %vm635 = vmor %vm633, %vm634
    %v636 = vsel %vm635, %v627, %v632
    %v637 = vrsqrt.pop %v616
    %v638 = vmul.f32 %v637, %v616
    %v639 = vmul.f32 %v638, %v637
    %v640 = vmul.f32 0.5, %v639
    %v641 = vsub.f32 1.5, %v640
    %v642 = vmul.f32 %v637, %v641
    %vm643 = vweird.f32 %v616
    %vm644 = vweird.f32 %v637
    %vm645 = vmor %vm643, %vm644
    %v646 = vsel %vm645, %v637, %v642
    %v647 = vmul.f32 %v596, %v626
    %v648 = vmul.f32 %v597, %v636
    %v649 = vmul.f32 %v598, %v646
    %v651 = vperm.slane %v575, 0
    %v653 = vmul.f32 %v647, %v651
    %v654 = vmul.f32 %v648, %v651
    %v655 = vmul.f32 %v649, %v651
    %v657 = vperm.slane %v576, 0
    %v659 = vadd.f32 %v653, %v657
    %v660 = vadd.f32 %v654, %v657
    %v661 = vadd.f32 %v655, %v657
    %v662 = vld [vmem:[%s12] sm:$0xff]
    %v663 = vld [vmem:[%s12 + $0x8] sm:$0xff]
    %v664 = vld [vmem:[%s12 + $0x10] sm:$0xff]
    %v665 = vld [vmem:[%s12 + $0x18] sm:$0xff]
    %v666 = vld [vmem:[%s12 + $0x20] sm:$0xff]
    %v667 = vld [vmem:[%s12 + $0x28] sm:$0xff]
    %v668 = vld [vmem:[%s12 + $0x30] sm:$0xff]
    %v669 = vld [vmem:[%s12 + $0x38] sm:$0xff]
    %v670 = vld [vmem:[%s13] sm:$0x1]
    %v672 = vperm.slane %v670, 0
    %v675 = vsel %vm148, %v659, 0
    %v678 = vsel %vm148, %v660, 0
    %v681 = vsel %vm148, %v661, 0
    %v684 = vsel %vm148, %v662, 0
    %v687 = vsel %vm148, %v663, 0
    %v690 = vsel %vm148, %v664, 0
    %v693 = vsel %vm148, %v665, 0
    %v696 = vsel %vm148, %v666, 0
    %v699 = vsel %vm148, %v667, 0
    %v702 = vsel %vm148, %v668, 0
    %v705 = vsel %vm148, %v669, 0
    %707 = vmatpush.xpose.msra.mxu0 0.0
    %708 = vmatpush.xpose.msra.mxu0 0.0
    %709 = vmatpush.xpose.msra.mxu0 0.0
    %710 = vmatpush.xpose.msra.mxu0 0.0
    %711 = vmatpush.xpose.msra.mxu0 0.0
    %712 = vmatpush.xpose.msra.mxu0 0.0
    %713 = vmatpush.xpose.msra.mxu0 0.0
    %714 = vmatpush.xpose.msra.mxu0 0.0
    %715 = vmatpush.xpose.msra.mxu0 %v705
    %716 = vmatpush.xpose.msra.mxu0 %v702
    %717 = vmatpush.xpose.msra.mxu0 %v699
    %718 = vmatpush.xpose.msra.mxu0 %v696
    %719 = vmatpush.xpose.msra.mxu0 %v693
    %720 = vmatpush.xpose.msra.mxu0 %v690
    %721 = vmatpush.xpose.msra.mxu0 %v687
    %722 = vmatpush.xpose.msra.mxu0 %v684
    %723 = vmatmul.f32.gmra.mxu0 %v675
    %v724 = vpop.f32.mrf.mxu0
    %v725 = vadd.f32 %v672, %v724
    %726 = vmatmul.f32.gmra.mxu0 %v678
    %v727 = vpop.f32.mrf.mxu0
    %v728 = vadd.f32 %v672, %v727
    %729 = vmatmul.f32.gmra.mxu0 %v681
    %v730 = vpop.f32.mrf.mxu0
    %v731 = vadd.f32 %v672, %v730
    %732 = vdwg.mxu0
    %v733 = vmax.f32 %v725, 0.0
    %v734 = vmax.f32 %v728, 0.0
    %v735 = vmax.f32 %v731, 0.0
    %v736 = vld [vmem:[#allocation8] sm:$0xff]
    %v737 = vld [vmem:[#allocation8 + $0x8] sm:$0xff]
    %v738 = vld [vmem:[#allocation8 + $0x10] sm:$0xff]
    %v739 = vld [vmem:[#allocation8 + $0x18] sm:$0xff]
    %v740 = vld [vmem:[%s15] sm:$0x1]
    %v742 = vperm.slane %v740, 0
    %vm744 = vcmask 523264
    %v746 = vsel %vm744, %v733, 0
    %v749 = vsel %vm744, %v734, 0
    %v752 = vsel %vm744, %v735, 0
    %v755 = vsel %vm744, %v736, 0
    %v758 = vsel %vm744, %v737, 0
    %v761 = vsel %vm744, %v738, 0
    %v764 = vsel %vm744, %v739, 0
    %766 = vmatpush.xpose.msra.mxu0 0.0
    %767 = vmatpush.xpose.msra.mxu0 0.0
    %768 = vmatpush.xpose.msra.mxu0 0.0
    %769 = vmatpush.xpose.msra.mxu0 0.0
    %770 = vmatpush.xpose.msra.mxu0 0.0
    %771 = vmatpush.xpose.msra.mxu0 0.0
    %772 = vmatpush.xpose.msra.mxu0 0.0
    %773 = vmatpush.xpose.msra.mxu0 0.0
    %774 = vmatpush.xpose.msra.mxu0 0.0
    %775 = vmatpush.xpose.msra.mxu0 0.0
    %776 = vmatpush.xpose.msra.mxu0 0.0
    %777 = vmatpush.xpose.msra.mxu0 0.0
    %778 = vmatpush.xpose.msra.mxu0 %v764
    %779 = vmatpush.xpose.msra.mxu0 %v761
    %780 = vmatpush.xpose.msra.mxu0 %v758
    %781 = vmatpush.xpose.msra.mxu0 %v755
    %782 = vmatmul.f32.gmra.mxu0 %v746
    %v783 = vpop.f32.mrf.mxu0
    %v784 = vadd.f32 %v742, %v783
    %785 = vmatmul.f32.gmra.mxu0 %v749
    %v786 = vpop.f32.mrf.mxu0
    %v787 = vadd.f32 %v742, %v786
    %788 = vmatmul.f32.gmra.mxu0 %v752
    %v789 = vpop.f32.mrf.mxu0
    %v790 = vadd.f32 %v742, %v789
    %791 = vdwg.mxu0
    %v792 = vadd.f32 %v659, %v784
    %v793 = vadd.f32 %v660, %v787
    %v794 = vadd.f32 %v661, %v790
    %v795 = vld [vmem:[#allocation5] sm:$0x1]
    %v796 = vld [vmem:[#allocation7] sm:$0x1]
    %v797 = vsel %vm148, %v792, 0.0
    %798 = vadd.xlane.f32.xlu0 %v797
    %v799 = vpop.xlane.xlu0 %798
    %v800 = vsel %vm148, %v793, 0.0
    %801 = vadd.xlane.f32.xlu0 %v800
    %v802 = vpop.xlane.xlu0 %801
    %v803 = vsel %vm148, %v794, 0.0
    %804 = vadd.xlane.f32.xlu0 %v803
    %v805 = vpop.xlane.xlu0 %804
    %v806 = vmul.f32 %v799, %v592
    %v807 = vmul.f32 %v802, %v592
    %v808 = vmul.f32 %v805, %v592
    %v809 = vsub.f32 %v792, %v806
    %v810 = vsub.f32 %v793, %v807
    %v811 = vsub.f32 %v794, %v808
    %v812 = vmul.f32 %v809, %v809
    %v813 = vmul.f32 %v810, %v810
    %v814 = vmul.f32 %v811, %v811
    %v815 = vsel %vm148, %v812, 0.0
    %816 = vadd.xlane.f32.xlu0 %v815
    %v817 = vpop.xlane.xlu0 %816
    %v818 = vsel %vm148, %v813, 0.0
    %819 = vadd.xlane.f32.xlu0 %v818
    %v820 = vpop.xlane.xlu0 %819
    %v821 = vsel %vm148, %v814, 0.0
    %822 = vadd.xlane.f32.xlu0 %v821
    %v823 = vpop.xlane.xlu0 %822
    %v824 = vmul.f32 %v817, %v592
    %v825 = vmul.f32 %v820, %v592
    %v826 = vmul.f32 %v823, %v592
    %v827 = vadd.f32 %v824, 1e-05
    %v828 = vadd.f32 %v825, 1e-05
    %v829 = vadd.f32 %v826, 1e-05
    %v830 = vrsqrt.pop %v827
    %v831 = vmul.f32 %v830, %v827
    %v832 = vmul.f32 %v831, %v830
    %v833 = vmul.f32 0.5, %v832
    %v834 = vsub.f32 1.5, %v833
    %v835 = vmul.f32 %v830, %v834
    %vm836 = vweird.f32 %v827
    %vm837 = vweird.f32 %v830
    %vm838 = vmor %vm836, %vm837
    %v839 = vsel %vm838, %v830, %v835
    %v840 = vrsqrt.pop %v828
    %v841 = vmul.f32 %v840, %v828
    %v842 = vmul.f32 %v841, %v840
    %v843 = vmul.f32 0.5, %v842
    %v844 = vsub.f32 1.5, %v843
    %v845 = vmul.f32 %v840, %v844
    %vm846 = vweird.f32 %v828
    %vm847 = vweird.f32 %v840
    %vm848 = vmor %vm846, %vm847
    %v849 = vsel %vm848, %v840, %v845
    %v850 = vrsqrt.pop %v829
    %v851 = vmul.f32 %v850, %v829
    %v852 = vmul.f32 %v851, %v850
    %v853 = vmul.f32 0.5, %v852
    %v854 = vsub.f32 1.5, %v853
    %v855 = vmul.f32 %v850, %v854
    %vm856 = vweird.f32 %v829
    %vm857 = vweird.f32 %v850
    %vm858 = vmor %vm856, %vm857
    %v859 = vsel %vm858, %v850, %v855
    %v860 = vmul.f32 %v809, %v839
    %v861 = vmul.f32 %v810, %v849
    %v862 = vmul.f32 %v811, %v859
    %v864 = vperm.slane %v795, 0
    %v866 = vmul.f32 %v860, %v864
    %v867 = vmul.f32 %v861, %v864
    %v868 = vmul.f32 %v862, %v864
    %v870 = vperm.slane %v796, 0
    %v872 = vadd.f32 %v866, %v870
    %v873 = vadd.f32 %v867, %v870
    %v874 = vadd.f32 %v868, %v870
    %s875 = scalar_lea.vmem %s4, 96
    %v876 = vld [vmem:[%s875] sm:$0xff]
    %v877 = vld [vmem:[%s875 + $0x8] sm:$0xff]
    %v878 = vld [vmem:[%s875 + $0x10] sm:$0xff]
    %v879 = vld [vmem:[%s875 + $0x18] sm:$0xff]
    %s880 = scalar_lea.vmem %s5, 3
    %v881 = vld [vmem:[%s880] sm:$0x1]
    %v883 = vperm.slane %v881, 0
    %v886 = vsel %vm148, %v872, 0
    %v889 = vsel %vm148, %v873, 0
    %v892 = vsel %vm148, %v874, 0
    %v895 = vsel %vm148, %v876, 0
    %v898 = vsel %vm148, %v877, 0
    %v901 = vsel %vm148, %v878, 0
    %v904 = vsel %vm148, %v879, 0
    %906 = vmatpush.xpose.msra.mxu0 0.0
    %907 = vmatpush.xpose.msra.mxu0 0.0
    %908 = vmatpush.xpose.msra.mxu0 0.0
    %909 = vmatpush.xpose.msra.mxu0 0.0
    %910 = vmatpush.xpose.msra.mxu0 0.0
    %911 = vmatpush.xpose.msra.mxu0 0.0
    %912 = vmatpush.xpose.msra.mxu0 0.0
    %913 = vmatpush.xpose.msra.mxu0 0.0
    %914 = vmatpush.xpose.msra.mxu0 0.0
    %915 = vmatpush.xpose.msra.mxu0 0.0
    %916 = vmatpush.xpose.msra.mxu0 0.0
    %917 = vmatpush.xpose.msra.mxu0 0.0
    %918 = vmatpush.xpose.msra.mxu0 %v904
    %919 = vmatpush.xpose.msra.mxu0 %v901
    %920 = vmatpush.xpose.msra.mxu0 %v898
    %921 = vmatpush.xpose.msra.mxu0 %v895
    %922 = vmatmul.f32.gmra.mxu0 %v886
    %v923 = vpop.f32.mrf.mxu0
    %v924 = vadd.f32 %v883, %v923
    %925 = vmatmul.f32.gmra.mxu0 %v889
    %v926 = vpop.f32.mrf.mxu0
    %v927 = vadd.f32 %v883, %v926
    %928 = vmatmul.f32.gmra.mxu0 %v892
    %v929 = vpop.f32.mrf.mxu0
    %v930 = vadd.f32 %v883, %v929
    %931 = vdwg.mxu0
    %v932 = vmul.f32 %v924, 0.35355338
    %v933 = vmul.f32 %v927, 0.35355338
    %v934 = vmul.f32 %v930, 0.35355338
    %s935 = scalar_lea.vmem %s4, 128
    %v936 = vld [vmem:[%s935] sm:$0xff]
    %v937 = vld [vmem:[%s935 + $0x8] sm:$0xff]
    %v938 = vld [vmem:[%s935 + $0x10] sm:$0xff]
    %v939 = vld [vmem:[%s935 + $0x18] sm:$0xff]
    %s940 = scalar_lea.vmem %s5, 4
    %v941 = vld [vmem:[%s940] sm:$0x1]
    %v943 = vperm.slane %v941, 0
    %v946 = vsel %vm148, %v936, 0
    %v949 = vsel %vm148, %v937, 0
    %v952 = vsel %vm148, %v938, 0
    %v955 = vsel %vm148, %v939, 0
    %957 = vmatpush.xpose.msra.mxu0 0.0
    %958 = vmatpush.xpose.msra.mxu0 0.0
    %959 = vmatpush.xpose.msra.mxu0 0.0
    %960 = vmatpush.xpose.msra.mxu0 0.0
    %961 = vmatpush.xpose.msra.mxu0 0.0
    %962 = vmatpush.xpose.msra.mxu0 0.0
    %963 = vmatpush.xpose.msra.mxu0 0.0
    %964 = vmatpush.xpose.msra.mxu0 0.0
    %965 = vmatpush.xpose.msra.mxu0 0.0
    %966 = vmatpush.xpose.msra.mxu0 0.0
    %967 = vmatpush.xpose.msra.mxu0 0.0
    %968 = vmatpush.xpose.msra.mxu0 0.0
    %969 = vmatpush.xpose.msra.mxu0 %v955
    %970 = vmatpush.xpose.msra.mxu0 %v952
    %971 = vmatpush.xpose.msra.mxu0 %v949
    %972 = vmatpush.xpose.msra.mxu0 %v946
    %973 = vmatmul.f32.gmra.mxu0 %v886
    %v974 = vpop.f32.mrf.mxu0
    %v975 = vadd.f32 %v943, %v974
    %976 = vmatmul.f32.gmra.mxu0 %v889
    %v977 = vpop.f32.mrf.mxu0
    %v978 = vadd.f32 %v943, %v977
    %979 = vmatmul.f32.gmra.mxu0 %v892
    %v980 = vpop.f32.mrf.mxu0
    %v981 = vadd.f32 %v943, %v980
    %982 = vdwg.mxu0
    %s983 = scalar_lea.vmem %s4, 160
    %v984 = vld [vmem:[%s983] sm:$0xff]
    %v985 = vld [vmem:[%s983 + $0x8] sm:$0xff]
    %v986 = vld [vmem:[%s983 + $0x10] sm:$0xff]
    %v987 = vld [vmem:[%s983 + $0x18] sm:$0xff]
    %s988 = scalar_lea.vmem %s5, 5
    %v989 = vld [vmem:[%s988] sm:$0x1]
    %v991 = vperm.slane %v989, 0
    %v994 = vsel %vm148, %v984, 0
    %v997 = vsel %vm148, %v985, 0
    %v1000 = vsel %vm148, %v986, 0
    %v1003 = vsel %vm148, %v987, 0
    %1005 = vmatpush.xpose.msra.mxu0 0.0
    %1006 = vmatpush.xpose.msra.mxu0 0.0
    %1007 = vmatpush.xpose.msra.mxu0 0.0
    %1008 = vmatpush.xpose.msra.mxu0 0.0
    %1009 = vmatpush.xpose.msra.mxu0 0.0
    %1010 = vmatpush.xpose.msra.mxu0 0.0
    %1011 = vmatpush.xpose.msra.mxu0 0.0
    %1012 = vmatpush.xpose.msra.mxu0 0.0
    %1013 = vmatpush.xpose.msra.mxu0 0.0
    %1014 = vmatpush.xpose.msra.mxu0 0.0
    %1015 = vmatpush.xpose.msra.mxu0 0.0
    %1016 = vmatpush.xpose.msra.mxu0 0.0
    %1017 = vmatpush.xpose.msra.mxu0 %v1003
    %1018 = vmatpush.xpose.msra.mxu0 %v1000
    %1019 = vmatpush.xpose.msra.mxu0 %v997
    %1020 = vmatpush.xpose.msra.mxu0 %v994
    %1021 = vmatmul.f32.gmra.mxu0 %v886
    %v1022 = vpop.f32.mrf.mxu0
    %v1023 = vadd.f32 %v991, %v1022
    %1024 = vmatmul.f32.gmra.mxu0 %v889
    %v1025 = vpop.f32.mrf.mxu0
    %v1026 = vadd.f32 %v991, %v1025
    %1027 = vmatmul.f32.gmra.mxu0 %v892
    %v1028 = vpop.f32.mrf.mxu0
    %v1029 = vadd.f32 %v991, %v1028
    %1030 = vdwg.mxu0
    %v1031 = vmul.f32 %v932, %v975
    %v1032 = vmul.f32 %v932, %v978
    %v1033 = vmul.f32 %v932, %v981
    %v1034 = vmul.f32 %v933, %v975
    %v1035 = vmul.f32 %v933, %v978
    %v1036 = vmul.f32 %v933, %v981
    %v1037 = vmul.f32 %v934, %v975
    %v1038 = vmul.f32 %v934, %v978
    %v1039 = vmul.f32 %v934, %v981
    %v1041 = vsel %vm148, %v1031, 0
    %v1044 = vsel %vm148, %v1032, 0
    %v1047 = vsel %vm148, %v1033, 0
    %v1050 = vsel %vm148, %v1034, 0
    %v1053 = vsel %vm148, %v1035, 0
    %v1056 = vsel %vm148, %v1036, 0
    %v1059 = vsel %vm148, %v1037, 0
    %v1062 = vsel %vm148, %v1038, 0
    %v1065 = vsel %vm148, %v1039, 0
    %1067 = vmatpush.msra.mxu0 0.0
    %1068 = vmatpush.msra.mxu0 0.0
    %1069 = vmatpush.msra.mxu0 0.0
    %1070 = vmatpush.msra.mxu0 0.0
    %1071 = vmatpush.msra.mxu0 0.0
    %1072 = vmatpush.msra.mxu0 0.0
    %1073 = vmatpush.msra.mxu0 0.0
    %1074 = vmatpush.msra.mxu0 0.0
    %1075 = vmatpush.msra.mxu0 0.0
    %1076 = vmatpush.msra.mxu0 0.0
    %1077 = vmatpush.msra.mxu0 0.0
    %1078 = vmatpush.msra.mxu0 0.0
    %1079 = vmatpush.msra.mxu0 %v120
    %1080 = vmatpush.msra.mxu0 %v119
    %1081 = vmatpush.msra.mxu0 %v118
    %1082 = vmatpush.msra.mxu0 %v117
    %1083 = vmatmul.f32.gmra.mxu0 %v1041
    %v1084 = vpop.f32.mrf.mxu0
    %v1085 = vadd.f32 0.0, %v1084
    %1086 = vmatmul.f32.gmra.mxu0 %v1044
    %v1087 = vpop.f32.mrf.mxu0
    %v1088 = vadd.f32 0.0, %v1087
    %1089 = vmatmul.f32.gmra.mxu0 %v1047
    %v1090 = vpop.f32.mrf.mxu0
    %v1091 = vadd.f32 0.0, %v1090
    %1092 = vmatmul.f32.gmra.mxu0 %v1050
    %v1093 = vpop.f32.mrf.mxu0
    %v1094 = vadd.f32 0.0, %v1093
    %1095 = vmatmul.f32.gmra.mxu0 %v1053
    %v1096 = vpop.f32.mrf.mxu0
    %v1097 = vadd.f32 0.0, %v1096
    %1098 = vmatmul.f32.gmra.mxu0 %v1056
    %v1099 = vpop.f32.mrf.mxu0
    %v1100 = vadd.f32 0.0, %v1099
    %1101 = vmatmul.f32.gmra.mxu0 %v1059
    %v1102 = vpop.f32.mrf.mxu0
    %v1103 = vadd.f32 0.0, %v1102
    %1104 = vmatmul.f32.gmra.mxu0 %v1062
    %v1105 = vpop.f32.mrf.mxu0
    %v1106 = vadd.f32 0.0, %v1105
    %1107 = vmatmul.f32.gmra.mxu0 %v1065
    %v1108 = vpop.f32.mrf.mxu0
    %v1109 = vadd.f32 0.0, %v1108
    %1110 = vdwg.mxu0
    %v1111 = vmax.f32 %v1085, %v1088
    %v1112 = vmax.f32 %v1111, %v1091
    %v1113 = vsub.f32 %v1085, %v1112
    %v1114 = vmul.f32 %v1113, 1.442695
    %v1115 = vpow.pop %v1114
    %v1116 = vsub.f32 %v1088, %v1112
    %v1117 = vmul.f32 %v1116, 1.442695
    %v1118 = vpow.pop %v1117
    %v1119 = vsub.f32 %v1091, %v1112
    %v1120 = vmul.f32 %v1119, 1.442695
    %v1121 = vpow.pop %v1120
    %v1122 = vadd.f32 %v1115, %v1118
    %v1123 = vadd.f32 %v1122, %v1121
    %v1124 = vrcp.pop %v1123
    %v1125 = vmul.f32 %v1115, %v1124
    %v1126 = vmul.f32 %v1118, %v1124
    %v1127 = vmul.f32 %v1121, %v1124
    %v1128 = vmax.f32 %v1094, %v1097
    %v1129 = vmax.f32 %v1128, %v1100
    %v1130 = vsub.f32 %v1094, %v1129
    %v1131 = vmul.f32 %v1130, 1.442695
    %v1132 = vpow.pop %v1131
    %v1133 = vsub.f32 %v1097, %v1129
    %v1134 = vmul.f32 %v1133, 1.442695
    %v1135 = vpow.pop %v1134
    %v1136 = vsub.f32 %v1100, %v1129
    %v1137 = vmul.f32 %v1136, 1.442695
    %v1138 = vpow.pop %v1137
    %v1139 = vadd.f32 %v1132, %v1135
    %v1140 = vadd.f32 %v1139, %v1138
    %v1141 = vrcp.pop %v1140
    %v1142 = vmul.f32 %v1132, %v1141
    %v1143 = vmul.f32 %v1135, %v1141
    %v1144 = vmul.f32 %v1138, %v1141
    %v1145 = vmax.f32 %v1103, %v1106
    %v1146 = vmax.f32 %v1145, %v1109
    %v1147 = vsub.f32 %v1103, %v1146
    %v1148 = vmul.f32 %v1147, 1.442695
    %v1149 = vpow.pop %v1148
    %v1150 = vsub.f32 %v1106, %v1146
    %v1151 = vmul.f32 %v1150, 1.442695
    %v1152 = vpow.pop %v1151
    %v1153 = vsub.f32 %v1109, %v1146
    %v1154 = vmul.f32 %v1153, 1.442695
    %v1155 = vpow.pop %v1154
    %v1156 = vadd.f32 %v1149, %v1152
    %v1157 = vadd.f32 %v1156, %v1155
    %v1158 = vrcp.pop %v1157
    %v1159 = vmul.f32 %v1149, %v1158
    %v1160 = vmul.f32 %v1152, %v1158
    %v1161 = vmul.f32 %v1155, %v1158
    %v1163 = vsel %vm426, %v1125, 0
    %v1166 = vsel %vm426, %v1126, 0
    %v1169 = vsel %vm426, %v1127, 0
    %v1172 = vsel %vm426, %v1142, 0
    %v1175 = vsel %vm426, %v1143, 0
    %v1178 = vsel %vm426, %v1144, 0
    %v1181 = vsel %vm426, %v1159, 0
    %v1184 = vsel %vm426, %v1160, 0
    %v1187 = vsel %vm426, %v1161, 0
    %1189 = vmatpush.msra.mxu0 0.0
    %1190 = vmatpush.msra.mxu0 0.0
    %1191 = vmatpush.msra.mxu0 0.0
    %1192 = vmatpush.msra.mxu0 0.0
    %1193 = vmatpush.msra.mxu0 0.0
    %1194 = vmatpush.msra.mxu0 0.0
    %1195 = vmatpush.msra.mxu0 0.0
    %1196 = vmatpush.msra.mxu0 0.0
    %1197 = vmatpush.msra.mxu0 0.0
    %1198 = vmatpush.msra.mxu0 0.0
    %1199 = vmatpush.msra.mxu0 0.0
    %1200 = vmatpush.msra.mxu0 0.0
    %1201 = vmatpush.msra.mxu0 0.0
    %1202 = vmatpush.msra.mxu0 0.0
    %1203 = vmatpush.msra.mxu0 0.0
    %1204 = vmatpush.msra.mxu0 %v456
    %1205 = vmatmul.f32.gmra.mxu0 %v1163
    %v1206 = vpop.f32.mrf.mxu0
    %v1207 = vadd.f32 0.0, %v1206
    %1208 = vmatmul.f32.gmra.mxu0 %v1166
    %v1209 = vpop.f32.mrf.mxu0
    %v1210 = vadd.f32 0.0, %v1209
    %1211 = vmatmul.f32.gmra.mxu0 %v1169
    %v1212 = vpop.f32.mrf.mxu0
    %v1213 = vadd.f32 0.0, %v1212
    %1214 = vmatmul.f32.gmra.mxu0 %v1172
    %v1215 = vpop.f32.mrf.mxu0
    %v1216 = vadd.f32 0.0, %v1215
    %1217 = vmatmul.f32.gmra.mxu0 %v1175
    %v1218 = vpop.f32.mrf.mxu0
    %v1219 = vadd.f32 0.0, %v1218
    %1220 = vmatmul.f32.gmra.mxu0 %v1178
    %v1221 = vpop.f32.mrf.mxu0
    %v1222 = vadd.f32 0.0, %v1221
    %1223 = vmatmul.f32.gmra.mxu0 %v1181
    %v1224 = vpop.f32.mrf.mxu0
    %v1225 = vadd.f32 0.0, %v1224
    %1226 = vmatmul.f32.gmra.mxu0 %v1184
    %v1227 = vpop.f32.mrf.mxu0
    %v1228 = vadd.f32 0.0, %v1227
    %1229 = vmatmul.f32.gmra.mxu0 %v1187
    %v1230 = vpop.f32.mrf.mxu0
    %v1231 = vadd.f32 0.0, %v1230
    %1232 = vdwg.mxu0
    %v1233 = vmul.f32 %v1207, %v1023
    %v1234 = vmul.f32 %v1210, %v1026
    %v1235 = vmul.f32 %v1213, %v1029
    %v1236 = vmul.f32 %v1216, %v1023
    %v1237 = vmul.f32 %v1219, %v1026
    %v1238 = vmul.f32 %v1222, %v1029
    %v1239 = vmul.f32 %v1225, %v1023
    %v1240 = vmul.f32 %v1228, %v1026
    %v1241 = vmul.f32 %v1231, %v1029
    %v1242 = vadd.f32 %v1233, %v1234
    %v1243 = vadd.f32 %v1242, %v1235
    %v1244 = vadd.f32 %v1236, %v1237
    %v1245 = vadd.f32 %v1244, %v1238
    %v1246 = vadd.f32 %v1239, %v1240
    %v1247 = vadd.f32 %v1246, %v1241
    %s1248 = scalar_lea.vmem [#allocation2], 32
    %v1249 = vld [vmem:[%s1248] sm:$0xff]
    %v1250 = vld [vmem:[%s1248 + $0x8] sm:$0xff]
    %v1251 = vld [vmem:[%s1248 + $0x10] sm:$0xff]
    %v1252 = vld [vmem:[%s1248 + $0x18] sm:$0xff]
    %s1253 = scalar_lea.vmem %s7, 1
    %v1254 = vld [vmem:[%s1253] sm:$0x1]
    %v1256 = vperm.slane %v1254, 0
    %v1259 = vsel %vm148, %v1243, 0
    %v1262 = vsel %vm148, %v1245, 0
    %v1265 = vsel %vm148, %v1247, 0
    %v1268 = vsel %vm148, %v1249, 0
    %v1271 = vsel %vm148, %v1250, 0
    %v1274 = vsel %vm148, %v1251, 0
    %v1277 = vsel %vm148, %v1252, 0
    %1279 = vmatpush.xpose.msra.mxu0 0.0
    %1280 = vmatpush.xpose.msra.mxu0 0.0
    %1281 = vmatpush.xpose.msra.mxu0 0.0
    %1282 = vmatpush.xpose.msra.mxu0 0.0
    %1283 = vmatpush.xpose.msra.mxu0 0.0
    %1284 = vmatpush.xpose.msra.mxu0 0.0
    %1285 = vmatpush.xpose.msra.mxu0 0.0
    %1286 = vmatpush.xpose.msra.mxu0 0.0
    %1287 = vmatpush.xpose.msra.mxu0 0.0
    %1288 = vmatpush.xpose.msra.mxu0 0.0
    %1289 = vmatpush.xpose.msra.mxu0 0.0
    %1290 = vmatpush.xpose.msra.mxu0 0.0
    %1291 = vmatpush.xpose.msra.mxu0 %v1277
    %1292 = vmatpush.xpose.msra.mxu0 %v1274
    %1293 = vmatpush.xpose.msra.mxu0 %v1271
    %1294 = vmatpush.xpose.msra.mxu0 %v1268
    %1295 = vmatmul.f32.gmra.mxu0 %v1259
    %v1296 = vpop.f32.mrf.mxu0
    %v1297 = vadd.f32 %v1256, %v1296
    %1298 = vmatmul.f32.gmra.mxu0 %v1262
    %v1299 = vpop.f32.mrf.mxu0
    %v1300 = vadd.f32 %v1256, %v1299
    %1301 = vmatmul.f32.gmra.mxu0 %v1265
    %v1302 = vpop.f32.mrf.mxu0
    %v1303 = vadd.f32 %v1256, %v1302
    %1304 = vdwg.mxu0
    %v1305 = vadd.f32 %v872, %v1297
    %v1306 = vadd.f32 %v873, %v1300
    %v1307 = vadd.f32 %v874, %v1303
    %s1308 = scalar_lea.vmem %s8, 1
    %v1309 = vld [vmem:[%s1308] sm:$0x1]
    %s1310 = scalar_lea.vmem %s9, 1
    %v1311 = vld [vmem:[%s1310] sm:$0x1]
    %v1312 = vsel %vm148, %v1305, 0.0
    %1313 = vadd.xlane.f32.xlu0 %v1312
    %v1314 = vpop.xlane.xlu0 %1313
    %v1315 = vsel %vm148, %v1306, 0.0
    %1316 = vadd.xlane.f32.xlu0 %v1315
    %v1317 = vpop.xlane.xlu0 %1316
    %v1318 = vsel %vm148, %v1307, 0.0
    %1319 = vadd.xlane.f32.xlu0 %v1318
    %v1320 = vpop.xlane.xlu0 %1319
    %v1321 = vmul.f32 %v1314, %v592
    %v1322 = vmul.f32 %v1317, %v592
    %v1323 = vmul.f32 %v1320, %v592
    %v1324 = vsub.f32 %v1305, %v1321
    %v1325 = vsub.f32 %v1306, %v1322
    %v1326 = vsub.f32 %v1307, %v1323
    %v1327 = vmul.f32 %v1324, %v1324
    %v1328 = vmul.f32 %v1325, %v1325
    %v1329 = vmul.f32 %v1326, %v1326
    %v1330 = vsel %vm148, %v1327, 0.0
    %1331 = vadd.xlane.f32.xlu0 %v1330
    %v1332 = vpop.xlane.xlu0 %1331
    %v1333 = vsel %vm148, %v1328, 0.0
    %1334 = vadd.xlane.f32.xlu0 %v1333
    %v1335 = vpop.xlane.xlu0 %1334
    %v1336 = vsel %vm148, %v1329, 0.0
    %1337 = vadd.xlane.f32.xlu0 %v1336
    %v1338 = vpop.xlane.xlu0 %1337
    %v1339 = vmul.f32 %v1332, %v592
    %v1340 = vmul.f32 %v1335, %v592
    %v1341 = vmul.f32 %v1338, %v592
    %v1342 = vadd.f32 %v1339, 1e-05
    %v1343 = vadd.f32 %v1340, 1e-05
    %v1344 = vadd.f32 %v1341, 1e-05
    %v1345 = vrsqrt.pop %v1342
    %v1346 = vmul.f32 %v1345, %v1342
    %v1347 = vmul.f32 %v1346, %v1345
    %v1348 = vmul.f32 0.5, %v1347
    %v1349 = vsub.f32 1.5, %v1348
    %v1350 = vmul.f32 %v1345, %v1349
    %vm1351 = vweird.f32 %v1342
    %vm1352 = vweird.f32 %v1345
    %vm1353 = vmor %vm1351, %vm1352
    %v1354 = vsel %vm1353, %v1345, %v1350
    %v1355 = vrsqrt.pop %v1343
    %v1356 = vmul.f32 %v1355, %v1343
    %v1357 = vmul.f32 %v1356, %v1355
    %v1358 = vmul.f32 0.5, %v1357
    %v1359 = vsub.f32 1.5, %v1358
    %v1360 = vmul.f32 %v1355, %v1359
    %vm1361 = vweird.f32 %v1343
    %vm1362 = vweird.f32 %v1355
    %vm1363 = vmor %vm1361, %vm1362
    %v1364 = vsel %vm1363, %v1355, %v1360
    %v1365 = vrsqrt.pop %v1344
    %v1366 = vmul.f32 %v1365, %v1344
    %v1367 = vmul.f32 %v1366, %v1365
    %v1368 = vmul.f32 0.5, %v1367
    %v1369 = vsub.f32 1.5, %v1368
    %v1370 = vmul.f32 %v1365, %v1369
    %vm1371 = vweird.f32 %v1344
    %vm1372 = vweird.f32 %v1365
    %vm1373 = vmor %vm1371, %vm1372
    %v1374 = vsel %vm1373, %v1365, %v1370
    %v1375 = vmul.f32 %v1324, %v1354
    %v1376 = vmul.f32 %v1325, %v1364
    %v1377 = vmul.f32 %v1326, %v1374
    %v1379 = vperm.slane %v1309, 0
    %v1381 = vmul.f32 %v1375, %v1379
    %v1382 = vmul.f32 %v1376, %v1379
    %v1383 = vmul.f32 %v1377, %v1379
    %v1385 = vperm.slane %v1311, 0
    %v1387 = vadd.f32 %v1381, %v1385
    %v1388 = vadd.f32 %v1382, %v1385
    %v1389 = vadd.f32 %v1383, %v1385
    %s1390 = scalar_lea.vmem %s12, 64
    %v1391 = vld [vmem:[%s1390] sm:$0xff]
    %v1392 = vld [vmem:[%s1390 + $0x8] sm:$0xff]
    %v1393 = vld [vmem:[%s1390 + $0x10] sm:$0xff]
    %v1394 = vld [vmem:[%s1390 + $0x18] sm:$0xff]
    %v1395 = vld [vmem:[%s1390 + $0x20] sm:$0xff]
    %v1396 = vld [vmem:[%s1390 + $0x28] sm:$0xff]
    %v1397 = vld [vmem:[%s1390 + $0x30] sm:$0xff]
    %v1398 = vld [vmem:[%s1390 + $0x38] sm:$0xff]
    %s1399 = scalar_lea.vmem %s13, 1
    %v1400 = vld [vmem:[%s1399] sm:$0x1]
    %v1402 = vperm.slane %v1400, 0
    %v1405 = vsel %vm148, %v1387, 0
    %v1408 = vsel %vm148, %v1388, 0
    %v1411 = vsel %vm148, %v1389, 0
    %v1414 = vsel %vm148, %v1391, 0
    %v1417 = vsel %vm148, %v1392, 0
    %v1420 = vsel %vm148, %v1393, 0
    %v1423 = vsel %vm148, %v1394, 0
    %v1426 = vsel %vm148, %v1395, 0
    %v1429 = vsel %vm148, %v1396, 0
    %v1432 = vsel %vm148, %v1397, 0
    %v1435 = vsel %vm148, %v1398, 0
    %1437 = vmatpush.xpose.msra.mxu0 0.0
    %1438 = vmatpush.xpose.msra.mxu0 0.0
    %1439 = vmatpush.xpose.msra.mxu0 0.0
    %1440 = vmatpush.xpose.msra.mxu0 0.0
    %1441 = vmatpush.xpose.msra.mxu0 0.0
    %1442 = vmatpush.xpose.msra.mxu0 0.0
    %1443 = vmatpush.xpose.msra.mxu0 0.0
    %1444 = vmatpush.xpose.msra.mxu0 0.0
    %1445 = vmatpush.xpose.msra.mxu0 %v1435
    %1446 = vmatpush.xpose.msra.mxu0 %v1432
    %1447 = vmatpush.xpose.msra.mxu0 %v1429
    %1448 = vmatpush.xpose.msra.mxu0 %v1426
    %1449 = vmatpush.xpose.msra.mxu0 %v1423
    %1450 = vmatpush.xpose.msra.mxu0 %v1420
    %1451 = vmatpush.xpose.msra.mxu0 %v1417
    %1452 = vmatpush.xpose.msra.mxu0 %v1414
    %1453 = vmatmul.f32.gmra.mxu0 %v1405
    %v1454 = vpop.f32.mrf.mxu0
    %v1455 = vadd.f32 %v1402, %v1454
    %1456 = vmatmul.f32.gmra.mxu0 %v1408
    %v1457 = vpop.f32.mrf.mxu0
    %v1458 = vadd.f32 %v1402, %v1457
    %1459 = vmatmul.f32.gmra.mxu0 %v1411
    %v1460 = vpop.f32.mrf.mxu0
    %v1461 = vadd.f32 %v1402, %v1460
    %1462 = vdwg.mxu0
    %v1463 = vmax.f32 %v1455, 0.0
    %v1464 = vmax.f32 %v1458, 0.0
    %v1465 = vmax.f32 %v1461, 0.0
    %s1466 = scalar_lea.vmem [#allocation8], 32
    %v1467 = vld [vmem:[%s1466] sm:$0xff]
    %v1468 = vld [vmem:[%s1466 + $0x8] sm:$0xff]
    %v1469 = vld [vmem:[%s1466 + $0x10] sm:$0xff]
    %v1470 = vld [vmem:[%s1466 + $0x18] sm:$0xff]
    %s1471 = scalar_lea.vmem %s15, 1
    %v1472 = vld [vmem:[%s1471] sm:$0x1]
    %v1474 = vperm.slane %v1472, 0
    %v1477 = vsel %vm744, %v1463, 0
    %v1480 = vsel %vm744, %v1464, 0
    %v1483 = vsel %vm744, %v1465, 0
    %v1486 = vsel %vm744, %v1467, 0
    %v1489 = vsel %vm744, %v1468, 0
    %v1492 = vsel %vm744, %v1469, 0
    %v1495 = vsel %vm744, %v1470, 0
    %1497 = vmatpush.xpose.msra.mxu0 0.0
    %1498 = vmatpush.xpose.msra.mxu0 0.0
    %1499 = vmatpush.xpose.msra.mxu0 0.0
    %1500 = vmatpush.xpose.msra.mxu0 0.0
    %1501 = vmatpush.xpose.msra.mxu0 0.0
    %1502 = vmatpush.xpose.msra.mxu0 0.0
    %1503 = vmatpush.xpose.msra.mxu0 0.0
    %1504 = vmatpush.xpose.msra.mxu0 0.0
    %1505 = vmatpush.xpose.msra.mxu0 0.0
    %1506 = vmatpush.xpose.msra.mxu0 0.0
    %1507 = vmatpush.xpose.msra.mxu0 0.0
    %1508 = vmatpush.xpose.msra.mxu0 0.0
    %1509 = vmatpush.xpose.msra.mxu0 %v1495
    %1510 = vmatpush.xpose.msra.mxu0 %v1492
    %1511 = vmatpush.xpose.msra.mxu0 %v1489
    %1512 = vmatpush.xpose.msra.mxu0 %v1486
    %1513 = vmatmul.f32.gmra.mxu0 %v1477
    %v1514 = vpop.f32.mrf.mxu0
    %v1515 = vadd.f32 %v1474, %v1514
    %1516 = vmatmul.f32.gmra.mxu0 %v1480
    %v1517 = vpop.f32.mrf.mxu0
    %v1518 = vadd.f32 %v1474, %v1517
    %1519 = vmatmul.f32.gmra.mxu0 %v1483
    %v1520 = vpop.f32.mrf.mxu0
    %v1521 = vadd.f32 %v1474, %v1520
    %1522 = vdwg.mxu0
    %v1523 = vadd.f32 %v1387, %v1515
    %v1524 = vadd.f32 %v1388, %v1518
    %v1525 = vadd.f32 %v1389, %v1521
    %s1526 = scalar_lea.vmem [#allocation5], 1
    %v1527 = vld [vmem:[%s1526] sm:$0x1]
    %s1528 = scalar_lea.vmem [#allocation7], 1
    %v1529 = vld [vmem:[%s1528] sm:$0x1]
    %v1530 = vsel %vm148, %v1523, 0.0
    %1531 = vadd.xlane.f32.xlu0 %v1530
    %v1532 = vpop.xlane.xlu0 %1531
    %v1533 = vsel %vm148, %v1524, 0.0
    %1534 = vadd.xlane.f32.xlu0 %v1533
    %v1535 = vpop.xlane.xlu0 %1534
    %v1536 = vsel %vm148, %v1525, 0.0
    %1537 = vadd.xlane.f32.xlu0 %v1536
    %v1538 = vpop.xlane.xlu0 %1537
    %v1539 = vmul.f32 %v1532, %v592
    %v1540 = vmul.f32 %v1535, %v592
    %v1541 = vmul.f32 %v1538, %v592
    %v1542 = vsub.f32 %v1523, %v1539
    %v1543 = vsub.f32 %v1524, %v1540
    %v1544 = vsub.f32 %v1525, %v1541
    %v1545 = vmul.f32 %v1542, %v1542
    %v1546 = vmul.f32 %v1543, %v1543
    %v1547 = vmul.f32 %v1544, %v1544
    %v1548 = vsel %vm148, %v1545, 0.0
    %1549 = vadd.xlane.f32.xlu0 %v1548
    %v1550 = vpop.xlane.xlu0 %1549
    %v1551 = vsel %vm148, %v1546, 0.0
    %1552 = vadd.xlane.f32.xlu0 %v1551
    %v1553 = vpop.xlane.xlu0 %1552
    %v1554 = vsel %vm148, %v1547, 0.0
    %1555 = vadd.xlane.f32.xlu0 %v1554
    %v1556 = vpop.xlane.xlu0 %1555
    %v1557 = vmul.f32 %v1550, %v592
    %v1558 = vmul.f32 %v1553, %v592
    %v1559 = vmul.f32 %v1556, %v592
    %v1560 = vadd.f32 %v1557, 1e-05
    %v1561 = vadd.f32 %v1558, 1e-05
    %v1562 = vadd.f32 %v1559, 1e-05
    %v1563 = vrsqrt.pop %v1560
    %v1564 = vmul.f32 %v1563, %v1560
    %v1565 = vmul.f32 %v1564, %v1563
    %v1566 = vmul.f32 0.5, %v1565
    %v1567 = vsub.f32 1.5, %v1566
    %v1568 = vmul.f32 %v1563, %v1567
    %vm1569 = vweird.f32 %v1560
    %vm1570 = vweird.f32 %v1563
    %vm1571 = vmor %vm1569, %vm1570
    %v1572 = vsel %vm1571, %v1563, %v1568
    %v1573 = vrsqrt.pop %v1561
    %v1574 = vmul.f32 %v1573, %v1561
    %v1575 = vmul.f32 %v1574, %v1573
    %v1576 = vmul.f32 0.5, %v1575
    %v1577 = vsub.f32 1.5, %v1576
    %v1578 = vmul.f32 %v1573, %v1577
    %vm1579 = vweird.f32 %v1561
    %vm1580 = vweird.f32 %v1573
    %vm1581 = vmor %vm1579, %vm1580
    %v1582 = vsel %vm1581, %v1573, %v1578
    %v1583 = vrsqrt.pop %v1562
    %v1584 = vmul.f32 %v1583, %v1562
    %v1585 = vmul.f32 %v1584, %v1583
    %v1586 = vmul.f32 0.5, %v1585
    %v1587 = vsub.f32 1.5, %v1586
    %v1588 = vmul.f32 %v1583, %v1587
    %vm1589 = vweird.f32 %v1562
    %vm1590 = vweird.f32 %v1583
    %vm1591 = vmor %vm1589, %vm1590
    %v1592 = vsel %vm1591, %v1583, %v1588
    %v1593 = vmul.f32 %v1542, %v1572
    %v1594 = vmul.f32 %v1543, %v1582
    %v1595 = vmul.f32 %v1544, %v1592
    %v1597 = vperm.slane %v1527, 0
    %v1599 = vmul.f32 %v1593, %v1597
    %v1600 = vmul.f32 %v1594, %v1597
    %v1601 = vmul.f32 %v1595, %v1597
    %v1603 = vperm.slane %v1529, 0
    %v1605 = vadd.f32 %v1599, %v1603
    %v1606 = vadd.f32 %v1600, %v1603
    %v1607 = vadd.f32 %v1601, %v1603
    %v1608 = vadd.f32 %v1605, %v1606
    %v1609 = vadd.f32 %v1608, %v1607
    %v1610 = vmul.f32 %v1609, 0.33333334
    %1611 = vst.msk [vmem:[#allocation10] sm:$0xff] %vm148, %v1610
    // Predicated region
    $region82: #{tpu_custom_call.1} parent=1 // pred_check
      _
    $region83: #{tpu_custom_call.1} parent=1 // pred_check_branch
      %1613 = sbr.rel (0) target = $region85
    $region84: #{tpu_custom_call.1} parent=1 // pred_region
      %1615 = vsyncadd [#allocation4], 0
      %s1617 = sshll.u32 [#allocation10], 4
      %s1618 = int_to_ptr.vmem [resolvable:$true] %s1617
      %s1619 = sshll.u32 %s16, 4
      %s1620 = int_to_ptr.hbm [resolvable:$true] %s1619
      %1622 = dma.vmem_to_hbm [thread:$0]  %s1618, 128, %s1620, [#allocation4]
    $region85: #{tpu_custom_call.1} parent=1 // pred_fallthru
      _
    // Predicated region
    $region86: #{tpu_custom_call.1} parent=1 // pred_check
      _
    $region87: #{tpu_custom_call.1} parent=1 // pred_check_branch
      %1624 = sbr.rel (0) target = $region89
    $region88: #{tpu_custom_call.1} parent=1 // pred_region
      %1626 = dma.done [#allocation4], 128
    $region89: #{tpu_custom_call.1} parent=1 // pred_fallthru
      _
    %1627 = vsyncpa [#allocation3], 1
    %1628 = vsyncpa [#allocation6], 1
    %1629 = vsyncpa [#allocation9], 1
    %1630 = vsyncpa [#allocation4], 1

</llo_original>
